<compile_context>
chip_gen: v7x
topology: tpu7x:2x2x1
jax: 0.10.0
libtpu: 0.0.40
codegen_flags: <defaults>
</compile_context>

<pallas_src>
import numpy as np
import jax
import jax.numpy as jnp
from jax.experimental import pallas as pl
from jax.experimental.pallas import tpu as pltpu

KERNEL_SET = (2, 3, 6, 7)
DILATION = 2
MAX_K = max(KERNEL_SET)          # 7 -> taps at temporal offsets 0, d, ..., 6d
NUM_TAPS = MAX_K


def _fold_params(branch_weights, branch_biases, cin, compute_dtype):
    """Fold the 4 branch convs into one (cout, 7*cin) tap-major weight (jnp ops, jit/grad safe)."""
    blocks = []
    for k, w in zip(KERNEL_SET, branch_weights):
        w = jnp.asarray(w)                                    # (cp, cin, 1, k)
        cp = w.shape[0]
        wt = jnp.transpose(w[:, :, 0, :], (0, 2, 1))          # (cp, k, cin), tap-major
        wt = wt.reshape(cp, k * cin)
        wt = jnp.pad(wt, ((0, 0), ((MAX_K - k) * cin, 0)))    # branch k uses the LAST k taps
        blocks.append(wt)
    wf = jnp.concatenate(blocks, axis=0).astype(compute_dtype)      # (cout, 7*cin)
    bias = jnp.concatenate([jnp.asarray(b) for b in branch_biases])
    bias = bias.reshape(-1, 1, 1).astype(jnp.float32)               # (cout, 1, 1)
    return wf, bias


def _make_kernel(dilation, t_out, compute_dtype):
    d = dilation

    def kernel(x_ref, w_ref, b_ref, o_ref):
        # x_ref: (cin, tr_h, W)  w_ref: (cout, 7*cin)  b_ref: (cout,1,1)
        # o_ref: (cout, tr_h, T_out)   -- native NCHW block on both ends.
        tr_h = x_ref.shape[1]
        cout, K = w_ref.shape

        xv = x_ref[...].astype(compute_dtype)              # (cin, tr_h, W)
        # rows -> batch (outer), channels -> sublanes, time stays on lanes.
        xv = pltpu.einshape("crw->rcw", xv)                # (tr_h, cin, W)

        # In-kernel im2col: 7 dilated taps, tap-major / cin-minor along the
        # contraction axis (matches the folded weight).  Unaligned lane
        # offsets m*d lower to XLU rotates -- idle slot in a DMA-bound kernel.
        taps = [xv[:, :, m * d:m * d + t_out] for m in range(NUM_TAPS)]
        xt = jnp.concatenate(taps, axis=1)                 # (tr_h, 7*cin, T_out)

        # Single folded contraction per row group: row-batched MXU matmul
        # (rows, cout, K) x (rows, K, T_out) -> (rows, cout, T_out), f32 acc.
        w_b = jnp.broadcast_to(w_ref[...][None], (tr_h, cout, K))
        acc = jnp.einsum("rok,rkt->rot", w_b, xt,
                         preferred_element_type=jnp.float32)
        acc = pltpu.einshape("rot->ort", acc)              # (cout, tr_h, T_out)
        o_ref[...] = (acc + b_ref[...]).astype(o_ref.dtype)

    return kernel


def _pick_row_tile(B, H, row_bytes, *, min_steps=8, budget=1 << 20):
    """Rows per grid step: a multiple of 8 (sublane tiling), sized so the live
    in-kernel footprint stays ~1 MB (v7x VMEM-safe) while keeping >= min_steps
    grid steps for DMA/compute pipelining and the v7x dual-TensorCore split."""
    if H <= 8:
        return H                              # block == full dim satisfies the (8,128) rule
    tr = min(H, max(8, budget // max(row_bytes, 1)))
    tr = max(8, (tr // 8) * 8)
    while tr > 8 and B * pl.cdiv(H, tr) < min_steps:
        tr -= 8
    return tr


def dilated_inception_pallas(x, branch_weights, branch_biases,
                             dilation=DILATION, compute_dtype=None):
    """x: (B, cin, H, W).  branch_weights[i]: (cp, cin, 1, k_i); branch_biases[i]: (cp,).

    Returns (B, cout, H, T_out), T_out = W - dilation*(MAX_K-1), in x.dtype.
    The kernel reads x and writes the output in native NCHW layout (one HBM
    pass each); pass a bf16 `x` to halve the streamed input bytes.
    """
    B, cin, H, W = x.shape
    d = int(dilation)
    T_out = W - d * (MAX_K - 1)
    assert T_out > 0, "sequence too short for the largest dilated kernel"
    cp = branch_weights[0].shape[0]
    cout = cp * len(KERNEL_SET)
    K = NUM_TAPS * cin
    if compute_dtype is None:
        compute_dtype = x.dtype

    wf, bias = _fold_params(branch_weights, branch_biases, cin, compute_dtype)

    itemsize = jnp.dtype(compute_dtype).itemsize
    row_bytes = (cin * W + K * T_out + 2 * cout * T_out) * itemsize
    tr_h = _pick_row_tile(B, H, row_bytes)
    grid = (B, pl.cdiv(H, tr_h))   # ragged last H-block is masked by Pallas; each
                                   # output row depends only on its own input row.

    kernel = _make_kernel(d, T_out, compute_dtype)
    return pl.pallas_call(
        kernel,
        out_shape=jax.ShapeDtypeStruct((B, cout, H, T_out), x.dtype),
        grid_spec=pltpu.PrefetchScalarGridSpec(
            num_scalar_prefetch=0,
            grid=grid,
            in_specs=[
                # native NCHW input: one (cin, tr_h, W) row group per step
                pl.BlockSpec((None, cin, tr_h, W), lambda b, j: (b, 0, j, 0)),
                pl.BlockSpec((cout, K), lambda b, j: (0, 0)),        # folded weight (resident)
                pl.BlockSpec((cout, 1, 1), lambda b, j: (0, 0, 0)),  # bias (resident)
            ],
            out_specs=pl.BlockSpec((None, cout, tr_h, T_out),
                                   lambda b, j: (b, 0, j, 0)),       # native NCHW output
        ),
        compiler_params=pltpu.CompilerParams(
            dimension_semantics=("parallel", "parallel")),
    )(x, wf, bias)


def dilated_inception_ref(x, branch_weights, branch_biases, dilation=DILATION):
    """Pure-JAX reference reproducing the PyTorch forward exactly."""
    outs = []
    for k, w, b in zip(KERNEL_SET, branch_weights, branch_biases):
        y = jax.lax.conv_general_dilated(
            x, w, window_strides=(1, 1), padding="VALID",
            rhs_dilation=(1, dilation),
            dimension_numbers=("NCHW", "OIHW", "NCHW"))
        outs.append(y + b[None, :, None, None])
    T_out = outs[-1].shape[3]
    outs = [o[..., -T_out:] for o in outs]
    return jnp.concatenate(outs, axis=1)


if __name__ == "__main__":
    # cin=8, cout=16 (4 per branch), B=2 batches, H=32 nodes, W=40 time steps,
    # dilation=2 -> T_out = 28; tr_h=8 -> grid=(2,4)=8 steps (pipelined, v7x-splittable).
    B, cin, cout, H, W = 2, 8, 16, 32, 40
    cp = cout // len(KERNEL_SET)

    key = jax.random.PRNGKey(0)
    kx, *kws = jax.random.split(key, 1 + 2 * len(KERNEL_SET))
    x = jax.random.normal(kx, (B, cin, H, W), dtype=jnp.float32)

    branch_weights, branch_biases = [], []
    for i, k in enumerate(KERNEL_SET):
        w = 0.1 * jax.random.normal(kws[2 * i], (cp, cin, 1, k), dtype=jnp.float32)
        b = 0.1 * jax.random.normal(kws[2 * i + 1], (cp,), dtype=jnp.float32)
        branch_weights.append(w)
        branch_biases.append(b)

    ref = dilated_inception_ref(x, branch_weights, branch_biases)

    # f32 path (bit-accurate to the conv semantics).
    out = dilated_inception_pallas(x, branch_weights, branch_biases)
    out = jax.block_until_ready(out)
    assert out.shape == ref.shape == (B, cout, H, W - DILATION * (MAX_K - 1))
    np.testing.assert_allclose(np.asarray(out), np.asarray(ref), rtol=1e-4, atol=1e-4)

    # bf16-streamed path: caller provides bf16 activations -> halved HBM read,
    # bf16 MXU operands, f32 accumulation, bf16 output (looser tolerance).
    out_bf16 = dilated_inception_pallas(x.astype(jnp.bfloat16),
                                        branch_weights, branch_biases)
    out_bf16 = jax.block_until_ready(out_bf16)
    np.testing.assert_allclose(np.asarray(out_bf16, dtype=np.float32),
                               np.asarray(ref), rtol=5e-2, atol=5e-2)

    print("KERNEL_OK")
</pallas_src>

<mosaic_0001>
module attributes {stable_mosaic.version = 11 : i64} {
  func.func @kernel(%arg0: i32, %arg1: i32, %arg2: memref<1x8x8x40xf32, #tpu.memory_space<vmem>>, %arg3: memref<16x56xf32, #tpu.memory_space<vmem>>, %arg4: memref<16x1x1xf32, #tpu.memory_space<vmem>>, %arg5: memref<1x16x8x28xf32, #tpu.memory_space<vmem>>) attributes {dimension_semantics = [#tpu.dimension_semantics<parallel>, #tpu.dimension_semantics<parallel>], iteration_bounds = array<i64: 2, 4>, scalar_prefetch = 0 : i64, scratch_operands = 0 : i64, tpu.core_type = #tpu.core_type<tc>, window_params = [{transform_indices = @transform_0, window_bounds = array<i64: 1, 8, 8, 40>}, {pipeline_mode = #tpu.pipeline_mode<synchronous>, transform_indices = @transform_1, window_bounds = array<i64: 16, 56>}, {pipeline_mode = #tpu.pipeline_mode<synchronous>, transform_indices = @transform_2, window_bounds = array<i64: 16, 1, 1>}, {transform_indices = @transform_3, window_bounds = array<i64: 1, 16, 8, 28>}]} {
    %c0 = arith.constant 0 : index
    %c0_0 = arith.constant 0 : index
    %c0_1 = arith.constant 0 : index
    %c0_2 = arith.constant 0 : index
    %0 = vector.load %arg2[%c0, %c0_0, %c0_1, %c0_2] : memref<1x8x8x40xf32, #tpu.memory_space<vmem>>, vector<1x8x8x40xf32>
    %1 = vector.shape_cast %0 : vector<1x8x8x40xf32> to vector<8x8x40xf32>
    %2 = tpu.transpose %1, [1, 0, 2] : vector<8x8x40xf32> -> vector<8x8x40xf32>
    %3 = vector.extract_strided_slice %2 {offsets = [0, 0, 0], sizes = [8, 8, 28], strides = [1, 1, 1]} : vector<8x8x40xf32> to vector<8x8x28xf32>
    %4 = vector.extract_strided_slice %2 {offsets = [0, 0, 2], sizes = [8, 8, 28], strides = [1, 1, 1]} : vector<8x8x40xf32> to vector<8x8x28xf32>
    %5 = vector.extract_strided_slice %2 {offsets = [0, 0, 4], sizes = [8, 8, 28], strides = [1, 1, 1]} : vector<8x8x40xf32> to vector<8x8x28xf32>
    %6 = vector.extract_strided_slice %2 {offsets = [0, 0, 6], sizes = [8, 8, 28], strides = [1, 1, 1]} : vector<8x8x40xf32> to vector<8x8x28xf32>
    %7 = vector.extract_strided_slice %2 {offsets = [0, 0, 8], sizes = [8, 8, 28], strides = [1, 1, 1]} : vector<8x8x40xf32> to vector<8x8x28xf32>
    %8 = vector.extract_strided_slice %2 {offsets = [0, 0, 10], sizes = [8, 8, 28], strides = [1, 1, 1]} : vector<8x8x40xf32> to vector<8x8x28xf32>
    %9 = vector.extract_strided_slice %2 {offsets = [0, 0, 12], sizes = [8, 8, 28], strides = [1, 1, 1]} : vector<8x8x40xf32> to vector<8x8x28xf32>
    %10 = tpu.concatenate %3, %4, %5, %6, %7, %8, %9 in 1 : vector<8x8x28xf32>, vector<8x8x28xf32>, vector<8x8x28xf32>, vector<8x8x28xf32>, vector<8x8x28xf32>, vector<8x8x28xf32>, vector<8x8x28xf32> -> vector<8x56x28xf32>
    %c0_3 = arith.constant 0 : index
    %c0_4 = arith.constant 0 : index
    %11 = vector.load %arg3[%c0_3, %c0_4] : memref<16x56xf32, #tpu.memory_space<vmem>>, vector<16x56xf32>
    %12 = vector.shape_cast %11 : vector<16x56xf32> to vector<1x16x56xf32>
    %13 = vector.shape_cast %12 : vector<1x16x56xf32> to vector<1x16x56xf32>
    %14 = vector.broadcast %13 : vector<1x16x56xf32> to vector<8x16x56xf32>
    "tpu.trace_start"() <{level = 10 : i32, message = "rok,rkt->rot"}> : () -> ()
    %cst = arith.constant dense<0.000000e+00> : vector<8x16x28xf32>
    %15 = tpu.matmul %14, %10, %cst {dimension_numbers = #tpu.dot_dimension_numbers<[2], [1], [1], [2], [0, 0, 0, 1, 1, 2], [0], [0]>} : vector<8x16x56xf32>, vector<8x56x28xf32>, vector<8x16x28xf32> -> vector<8x16x28xf32>
    "tpu.trace_stop"() : () -> ()
    %16 = tpu.transpose %15, [1, 0, 2] : vector<8x16x28xf32> -> vector<16x8x28xf32>
    %c0_5 = arith.constant 0 : index
    %c0_6 = arith.constant 0 : index
    %c0_7 = arith.constant 0 : index
    %17 = vector.load %arg4[%c0_5, %c0_6, %c0_7] : memref<16x1x1xf32, #tpu.memory_space<vmem>>, vector<16x1x1xf32>
    %18 = vector.broadcast %17 : vector<16x1x1xf32> to vector<16x8x28xf32>
    %19 = arith.addf %16, %18 : vector<16x8x28xf32>
    %c0_8 = arith.constant 0 : index
    %c0_9 = arith.constant 0 : index
    %c0_10 = arith.constant 0 : index
    %c0_11 = arith.constant 0 : index
    %20 = vector.load %arg5[%c0_8, %c0_9, %c0_10, %c0_11] : memref<1x16x8x28xf32, #tpu.memory_space<vmem>>, vector<1x16x8x28xf32>
    %21 = vector.shape_cast %20 : vector<1x16x8x28xf32> to vector<16x8x28xf32>
    %22 = vector.shape_cast %19 : vector<16x8x28xf32> to vector<1x16x8x28xf32>
    tpu.vector_store %arg5[%c0_8, %c0_9, %c0_10, %c0_11], %22 {strides = array<i32>} : memref<1x16x8x28xf32, #tpu.memory_space<vmem>>, vector<1x16x8x28xf32>,
    return
  }
  func.func @transform_0(%arg0: i32, %arg1: i32) -> (i32, i32, i32, i32) {
    %c0_i32 = arith.constant 0 : i32
    %c0_i32_0 = arith.constant 0 : i32
    %c0_i32_1 = arith.constant 0 : i32
    return %arg0, %c0_i32, %arg1, %c0_i32_0 : i32, i32, i32, i32
  }
  func.func @transform_1(%arg0: i32, %arg1: i32) -> (i32, i32) {
    %c0_i32 = arith.constant 0 : i32
    %c0_i32_0 = arith.constant 0 : i32
    %c0_i32_1 = arith.constant 0 : i32
    return %c0_i32, %c0_i32_0 : i32, i32
  }
  func.func @transform_2(%arg0: i32, %arg1: i32) -> (i32, i32, i32) {
    %c0_i32 = arith.constant 0 : i32
    %c0_i32_0 = arith.constant 0 : i32
    %c0_i32_1 = arith.constant 0 : i32
    %c0_i32_2 = arith.constant 0 : i32
    return %c0_i32, %c0_i32_0, %c0_i32_1 : i32, i32, i32
  }
  func.func @transform_3(%arg0: i32, %arg1: i32) -> (i32, i32, i32, i32) {
    %c0_i32 = arith.constant 0 : i32
    %c0_i32_0 = arith.constant 0 : i32
    %c0_i32_1 = arith.constant 0 : i32
    return %arg0, %c0_i32, %arg1, %c0_i32_0 : i32, i32, i32, i32
  }
}

</mosaic_0001>

<llo_original>
// kernel: tpu_custom_call.1
$region0: #{tpu_custom_call.1}
  #allocation0 [shape = 'u32[]', space=smem, size = 0x4, offset = 0x4, fixed_abs, tag = 'smem constant byte address 0x4 - core index']
  #allocation1 [shape = 'u32[144,128]{1,0:T(1,128)}', space=vmem, size = 0x12000, scoped, tag = 'internal scratch']
  %s0 = inlined_call_operand.hbm [shape: f32[2,8,32,40], index: 0, kind: input, shape index: {}]
  %s1 = inlined_call_operand.vmem [shape: f32[16,56], index: 1, kind: input, shape index: {}]
  %s2 = inlined_call_operand.vmem [shape: f32[16,1,1], index: 2, kind: input, shape index: {}]
  %s3 = inlined_call_operand.vmem [shape: f32[2,16,32,28], index: 3, kind: output, shape index: {}]
  %s4 = sld [smem:[#allocation0]]
  $region83: #{tpu_custom_call.1} parent=0
    _
  %s6 = ssub.s32 1, %s4
  %s7 = scalar_select 0, %s6, %s4
  $region1: #{tpu_custom_call.1} parent=0
    #allocation2 [shape = 'u8[65536]{0}', space=vmem, size = 0x10000, scoped, tag = 'input window, operand 0']
    #allocation3 [shape = 's32[2]{0}', space=sflag, size = 0x8, scoped, tag = 'scoped memory for tpu_custom_call.1']
    #allocation4 [shape = 'u8[131072]{0}', space=vmem, size = 0x20000, scoped, tag = 'output window, operand 0']
    %8 = vsyncpa [#allocation3], 0
    %s9 = scalar_lea.sflag [#allocation3], 1
    %10 = vsyncpa %s9, 0
    loop: start=0, step=1, limit=10
    $region2: #{tpu_custom_call.1} parent=1 // loop_pre_header
      _
    $region3: #{tpu_custom_call.1} parent=1 // loop_header
      %s12 = sphi 0, %s16
      %p13 = scmp.ge.s32.totalorder %s12, 10
      %s19 = sphi 0, %s31
      %s20 = sphi 0, %s27
      %s21 = sphi 0, %s19
      %s22 = sphi 0, %s20
      %s23 = sphi 0, %s21
      %s24 = sphi 0, %s22
      %s36 = sphi 0, %s38
      %s39 = sphi 0, %s36
      %s40 = sphi 0, %s39
      %s56 = sphi 0, %s40
      %s60 = sphi 0, %s60
      %s62 = sphi 0, %s60
      %s63 = sphi 0, %s62
      %s77 = sphi 0, %s63
      %s81 = sphi 0, %s81
      %s83 = sphi 0, %s81
      %s84 = sphi 0, %s83
      %s98 = sphi 0, %s84
      %s106 = sphi 0, %s108
      %s109 = sphi 0, %s106
      %s110 = sphi 0, %s109
      %s126 = sphi 0, %s110
    $region4: #{tpu_custom_call.1} parent=1 // loop_header_branch
      %15 = sbr.rel (%p13) target = $region8
    $region5: #{tpu_custom_call.1} parent=1 // loop_body
      %s17 = ssub.s32 %s12, 1
      %s18 = ssub.s32 %s12, 2
      %s25 = sadd.s32 1, %s20
      %p26 = scmp.ge.s32.totalorder %s25, 4
      %s27 = scalar_select %p26, 0, %s25
      %s28 = sadd.s32 1, %s19
      %s29 = scalar_select %p26, %s28, %s19
      %p30 = scmp.ge.s32.totalorder %s29, 2
      %s31 = scalar_select %p30, 0, %s29
      %s32 = ssub.s32 %s19, %s31
      %s33 = ssub.s32 %s20, %s27
      %s34 = sor.u32 %s32, %s33
      %p35 = scmp.eq.s32.totalorder %s34, 0
      %s37 = sadd.s32 %s36, 1
      %s38 = scalar_select %p35, %s36, %s37
      %p41 = pneg %p35
      %p42 = scmp.eq.s32.totalorder %s12, 7
      %p43 = por %p41, %p42
      %p44 = scmp.ne.s32.totalorder %s36, %s39
      %p45 = scmp.eq.s32.totalorder %s12, 0
      %p46 = por %p44, %p45
      %p47 = scmp.ne.s32.totalorder %s36, %s39
      %p48 = scmp.eq.s32.totalorder %s17, 7
      %p49 = por %p47, %p48
      %p50 = scmp.ne.s32.totalorder %s39, %s40
      %p51 = scmp.eq.s32.totalorder %s17, 0
      %p52 = por %p50, %p51
      %p53 = scmp.ne.s32.totalorder %s39, %s40
      %p54 = scmp.eq.s32.totalorder %s18, 7
      %p55 = por %p53, %p54
      %p57 = scmp.ne.s32.totalorder %s40, %s56
      %p58 = scmp.eq.s32.totalorder %s18, 0
      %p59 = por %p57, %p58
      %s61 = sadd.s32 %s60, 1
      %p64 = scmp.eq.s32.totalorder %s12, 7
      %p65 = scmp.ne.s32.totalorder %s60, %s62
      %p66 = scmp.eq.s32.totalorder %s12, 0
      %p67 = por %p65, %p66
      %p68 = scmp.ne.s32.totalorder %s60, %s62
      %p69 = scmp.eq.s32.totalorder %s17, 7
      %p70 = por %p68, %p69
      %p71 = scmp.ne.s32.totalorder %s62, %s63
      %p72 = scmp.eq.s32.totalorder %s17, 0
      %p73 = por %p71, %p72
      %p74 = scmp.ne.s32.totalorder %s62, %s63
      %p75 = scmp.eq.s32.totalorder %s18, 7
      %p76 = por %p74, %p75
      %p78 = scmp.ne.s32.totalorder %s63, %s77
      %p79 = scmp.eq.s32.totalorder %s18, 0
      %p80 = por %p78, %p79
      %s82 = sadd.s32 %s81, 1
      %p85 = scmp.eq.s32.totalorder %s12, 7
      %p86 = scmp.ne.s32.totalorder %s81, %s83
      %p87 = scmp.eq.s32.totalorder %s12, 0
      %p88 = por %p86, %p87
      %p89 = scmp.ne.s32.totalorder %s81, %s83
      %p90 = scmp.eq.s32.totalorder %s17, 7
      %p91 = por %p89, %p90
      %p92 = scmp.ne.s32.totalorder %s83, %s84
      %p93 = scmp.eq.s32.totalorder %s17, 0
      %p94 = por %p92, %p93
      %p95 = scmp.ne.s32.totalorder %s83, %s84
      %p96 = scmp.eq.s32.totalorder %s18, 7
      %p97 = por %p95, %p96
      %p99 = scmp.ne.s32.totalorder %s84, %s98
      %p100 = scmp.eq.s32.totalorder %s18, 0
      %p101 = por %p99, %p100
      %s102 = ssub.s32 %s19, %s31
      %s103 = ssub.s32 %s20, %s27
      %s104 = sor.u32 %s102, %s103
      %p105 = scmp.eq.s32.totalorder %s104, 0
      %s107 = sadd.s32 %s106, 1
      %s108 = scalar_select %p105, %s106, %s107
      %p111 = pneg %p105
      %p112 = scmp.eq.s32.totalorder %s12, 7
      %p113 = por %p111, %p112
      %p114 = scmp.ne.s32.totalorder %s106, %s109
      %p115 = scmp.eq.s32.totalorder %s12, 0
      %p116 = por %p114, %p115
      %p117 = scmp.ne.s32.totalorder %s106, %s109
      %p118 = scmp.eq.s32.totalorder %s17, 7
      %p119 = por %p117, %p118
      %p120 = scmp.ne.s32.totalorder %s109, %s110
      %p121 = scmp.eq.s32.totalorder %s17, 0
      %p122 = por %p120, %p121
      %p123 = scmp.ne.s32.totalorder %s109, %s110
      %p124 = scmp.eq.s32.totalorder %s18, 7
      %p125 = por %p123, %p124
      %p127 = scmp.ne.s32.totalorder %s110, %s126
      %p128 = scmp.eq.s32.totalorder %s18, 0
      %p129 = por %p127, %p128
      %p130 = scmp.le.s32.totalorder 1, %s12
      %p131 = scmp.lt.s32.totalorder %s12, 9
      %p132 = pnand %p130, %p131
      %p133 = pneg %p132
      // Predicated region
      $region9: #{tpu_custom_call.1} parent=5 // pred_check
        _
      $region10: #{tpu_custom_call.1} parent=5 // pred_check_branch
        %135 = sbr.rel (%p132) target = $region12
      $region11: #{tpu_custom_call.1} parent=5 // pred_region
        %s136 = ssub.s32 %s12, 1
        // Predicated region
        $region13: #{tpu_custom_call.1} parent=11 // pred_check
          %p137 = pneg %p73
        $region14: #{tpu_custom_call.1} parent=11 // pred_check_branch
          %139 = sbr.rel (%p137) target = $region16
        $region15: #{tpu_custom_call.1} parent=11 // pred_region
          _
        $region16: #{tpu_custom_call.1} parent=11 // pred_fallthru
          _
        // Predicated region
        $region17: #{tpu_custom_call.1} parent=11 // pred_check
          %p140 = pneg %p94
        $region18: #{tpu_custom_call.1} parent=11 // pred_check_branch
          %142 = sbr.rel (%p140) target = $region20
        $region19: #{tpu_custom_call.1} parent=11 // pred_region
          _
        $region20: #{tpu_custom_call.1} parent=11 // pred_fallthru
          _
      $region12: #{tpu_custom_call.1} parent=5 // pred_fallthru
        _
      %p143 = scmp.lt.s32.totalorder %s12, 8
      // Predicated region
      $region21: #{tpu_custom_call.1} parent=5 // pred_check
        %p144 = pneg %p143
      $region22: #{tpu_custom_call.1} parent=5 // pred_check_branch
        %146 = sbr.rel (%p144) target = $region24
      $region23: #{tpu_custom_call.1} parent=5 // pred_region
        // Predicated region
        $region25: #{tpu_custom_call.1} parent=23 // pred_check
          %p147 = pneg %p46
        $region26: #{tpu_custom_call.1} parent=23 // pred_check_branch
          %149 = sbr.rel (%p147) target = $region28
        $region27: #{tpu_custom_call.1} parent=23 // pred_region
          %s150 = sand.u32 %s36, 1
          %s151 = scalar_lea.sflag [#allocation3], %s150
          %s152 = sand.u32 %s36, 1
          %s153 = smul.addr %s152, 64
          %s154 = scalar_lea.vmem [#allocation2], %s153
          %s156 = ssub.s32 1024, 1024
          %157 = vsyncadd %s151, %s156
          %s158 = smul.addr %s19, 32
          %s159 = sadd.s32 %s20, %s158
          %s160 = smul.addr %s159, 128
          %s161 = scalar_lea.hbm %s0, %s160
          %s162 = sshll.u32 %s154, 4
          %s163 = int_to_ptr.vmem [resolvable:$true] %s162
          %168 = dma.hbm_to_vmem [thread:$0]  %s161, 1024, %s163, %s151, 512, 128, 8
        $region28: #{tpu_custom_call.1} parent=23 // pred_fallthru
          _
      $region24: #{tpu_custom_call.1} parent=5 // pred_fallthru
        _
      %p169 = scmp.le.s32.totalorder 1, %s12
      %p170 = scmp.lt.s32.totalorder %s12, 9
      %p171 = pnand %p169, %p170
      %p172 = pneg %p171
      // Predicated region
      $region29: #{tpu_custom_call.1} parent=5 // pred_check
        _
      $region30: #{tpu_custom_call.1} parent=5 // pred_check_branch
        %174 = sbr.rel (%p171) target = $region32
      $region31: #{tpu_custom_call.1} parent=5 // pred_region
        %s175 = ssub.s32 %s12, 1
        %s176 = sand.u32 %s39, 1
        %s177 = scalar_lea.sflag [#allocation3], %s176
        %s178 = sand.u32 %s39, 1
        %s179 = smul.addr %s178, 64
        %s180 = scalar_lea.vmem [#allocation2], %s179
        // Predicated region
        $region33: #{tpu_custom_call.1} parent=31 // pred_check
          %p181 = pneg %p52
        $region34: #{tpu_custom_call.1} parent=31 // pred_check_branch
          %183 = sbr.rel (%p181) target = $region36
        $region35: #{tpu_custom_call.1} parent=31 // pred_region
          %184 = dma.done %s177, 1024
        $region36: #{tpu_custom_call.1} parent=31 // pred_fallthru
          _
        %s185 = sand.u32 %s39, 1
        %s186 = scalar_lea.sflag [#allocation3], %s185
        %s187 = sand.u32 %s39, 1
        %s188 = smul.addr %s187, 64
        %s189 = scalar_lea.vmem [#allocation2], %s188
        %p190 = pneg %p52
        %p191 = pneg %p49
        %p192 = pneg %p73
        %p193 = pneg %p70
        %p194 = pneg %p94
        %p195 = pneg %p91
        %p196 = pneg %p122
        %p197 = pneg %p119
        %s198 = sand.u32 %s109, 1
        %s199 = sand.u32 %s109, 1
        %s200 = smul.addr %s199, 128
        %s201 = scalar_lea.vmem [#allocation4], %s200
        %v202 = vld [vmem:[%s180] sm:$0xff]
        %v203 = vld [vmem:[%s180 + $0x8] sm:$0xff]
        %v204 = vld [vmem:[%s180 + $0x10] sm:$0xff]
        %v205 = vld [vmem:[%s180 + $0x18] sm:$0xff]
        %v206 = vld [vmem:[%s180 + $0x20] sm:$0xff]
        %v207 = vld [vmem:[%s180 + $0x28] sm:$0xff]
        %v208 = vld [vmem:[%s180 + $0x30] sm:$0xff]
        %v209 = vld [vmem:[%s180 + $0x38] sm:$0xff]
        %v210 = vcombine.low %v202, %v204
        %v211 = vcombine.high %v202, %v204
        %v213 = vunpack.c.l.s4 1983009808
        %v214 = vunpack.c.0.s8 %v213
        %v215 = vlaneseq
        %v216 = vshrl.u32 %v215, 7
        %v217 = vsub.s32 %v214, %v216
        %v218 = vrot.slane %v210, %v217
        %v220 = vunpack.c.l.s4 1983009808
        %v221 = vunpack.c.0.s8 %v220
        %v222 = vlaneseq
        %v223 = vshrl.u32 %v222, 7
        %v224 = vsub.s32 %v221, %v223
        %v225 = vrot.slane %v211, %v224
        %v226 = vcombine.low %v203, %v205
        %v227 = vcombine.high %v203, %v205
        %v229 = vunpack.c.l.s4 1983009808
        %v230 = vunpack.c.0.s8 %v229
        %v231 = vlaneseq
        %v232 = vshrl.u32 %v231, 7
        %v233 = vsub.s32 %v230, %v232
        %v234 = vrot.slane %v226, %v233
        %v236 = vunpack.c.l.s4 1983009808
        %v237 = vunpack.c.0.s8 %v236
        %v238 = vlaneseq
        %v239 = vshrl.u32 %v238, 7
        %v240 = vsub.s32 %v237, %v239
        %v241 = vrot.slane %v227, %v240
        %v242 = vcombine.low %v206, %v208
        %v243 = vcombine.high %v206, %v208
        %v245 = vunpack.c.l.s4 1983009808
        %v246 = vunpack.c.0.s8 %v245
        %v247 = vlaneseq
        %v248 = vshrl.u32 %v247, 7
        %v249 = vsub.s32 %v246, %v248
        %v250 = vrot.slane %v242, %v249
        %v252 = vunpack.c.l.s4 1983009808
        %v253 = vunpack.c.0.s8 %v252
        %v254 = vlaneseq
        %v255 = vshrl.u32 %v254, 7
        %v256 = vsub.s32 %v253, %v255
        %v257 = vrot.slane %v243, %v256
        %v258 = vcombine.low %v207, %v209
        %v259 = vcombine.high %v207, %v209
        %v261 = vunpack.c.l.s4 1983009808
        %v262 = vunpack.c.0.s8 %v261
        %v263 = vlaneseq
        %v264 = vshrl.u32 %v263, 7
        %v265 = vsub.s32 %v262, %v264
        %v266 = vrot.slane %v258, %v265
        %v268 = vunpack.c.l.s4 1983009808
        %v269 = vunpack.c.0.s8 %v268
        %v270 = vlaneseq
        %v271 = vshrl.u32 %v270, 7
        %v272 = vsub.s32 %v269, %v271
        %v273 = vrot.slane %v259, %v272
        %v274 = vcombine.low %v218, %v234
        %v275 = vcombine.high %v218, %v234
        %v277 = vunpack.c.l.s4 1934713408
        %v278 = vunpack.c.0.s8 %v277
        %v279 = vlaneseq
        %v280 = vshrl.u32 %v279, 7
        %v281 = vsub.s32 %v278, %v280
        %v282 = vrot.slane %v274, %v281
        %v284 = vunpack.c.l.s4 1934713408
        %v285 = vunpack.c.0.s8 %v284
        %v286 = vlaneseq
        %v287 = vshrl.u32 %v286, 7
        %v288 = vsub.s32 %v285, %v287
        %v289 = vrot.slane %v275, %v288
        %v290 = vcombine.low %v225, %v241
        %v291 = vcombine.high %v225, %v241
        %v293 = vunpack.c.l.s4 1934713408
        %v294 = vunpack.c.0.s8 %v293
        %v295 = vlaneseq
        %v296 = vshrl.u32 %v295, 7
        %v297 = vsub.s32 %v294, %v296
        %v298 = vrot.slane %v290, %v297
        %v300 = vunpack.c.l.s4 1934713408
        %v301 = vunpack.c.0.s8 %v300
        %v302 = vlaneseq
        %v303 = vshrl.u32 %v302, 7
        %v304 = vsub.s32 %v301, %v303
        %v305 = vrot.slane %v291, %v304
        %v306 = vcombine.low %v250, %v266
        %v307 = vcombine.high %v250, %v266
        %v309 = vunpack.c.l.s4 1934713408
        %v310 = vunpack.c.0.s8 %v309
        %v311 = vlaneseq
        %v312 = vshrl.u32 %v311, 7
        %v313 = vsub.s32 %v310, %v312
        %v314 = vrot.slane %v306, %v313
        %v316 = vunpack.c.l.s4 1934713408
        %v317 = vunpack.c.0.s8 %v316
        %v318 = vlaneseq
        %v319 = vshrl.u32 %v318, 7
        %v320 = vsub.s32 %v317, %v319
        %v321 = vrot.slane %v307, %v320
        %v322 = vcombine.low %v257, %v273
        %v323 = vcombine.high %v257, %v273
        %v325 = vunpack.c.l.s4 1934713408
        %v326 = vunpack.c.0.s8 %v325
        %v327 = vlaneseq
        %v328 = vshrl.u32 %v327, 7
        %v329 = vsub.s32 %v326, %v328
        %v330 = vrot.slane %v322, %v329
        %v332 = vunpack.c.l.s4 1934713408
        %v333 = vunpack.c.0.s8 %v332
        %v334 = vlaneseq
        %v335 = vshrl.u32 %v334, 7
        %v336 = vsub.s32 %v333, %v335
        %v337 = vrot.slane %v323, %v336
        %v338 = vcombine.low %v282, %v314
        %v339 = vcombine.high %v282, %v314
        %v340 = vcombine.low %v289, %v321
        %v341 = vcombine.high %v289, %v321
        %v342 = vcombine.low %v298, %v330
        %v343 = vcombine.high %v298, %v330
        %v344 = vcombine.low %v305, %v337
        %v345 = vcombine.high %v305, %v337
        %354 = vrot.lane.b32.xlu0 %v338, 126
        %v355 = vpop.permute.xlu0 %354
        %356 = vrot.lane.b32.xlu0 %v339, 126
        %v357 = vpop.permute.xlu0 %356
        %358 = vrot.lane.b32.xlu0 %v340, 126
        %v359 = vpop.permute.xlu0 %358
        %360 = vrot.lane.b32.xlu0 %v341, 126
        %v361 = vpop.permute.xlu0 %360
        %362 = vrot.lane.b32.xlu0 %v342, 126
        %v363 = vpop.permute.xlu0 %362
        %364 = vrot.lane.b32.xlu0 %v343, 126
        %v365 = vpop.permute.xlu0 %364
        %366 = vrot.lane.b32.xlu0 %v344, 126
        %v367 = vpop.permute.xlu0 %366
        %368 = vrot.lane.b32.xlu0 %v345, 126
        %v369 = vpop.permute.xlu0 %368
        %378 = vrot.lane.b32.xlu0 %v338, 124
        %v379 = vpop.permute.xlu0 %378
        %380 = vrot.lane.b32.xlu0 %v339, 124
        %v381 = vpop.permute.xlu0 %380
        %382 = vrot.lane.b32.xlu0 %v340, 124
        %v383 = vpop.permute.xlu0 %382
        %384 = vrot.lane.b32.xlu0 %v341, 124
        %v385 = vpop.permute.xlu0 %384
        %386 = vrot.lane.b32.xlu0 %v342, 124
        %v387 = vpop.permute.xlu0 %386
        %388 = vrot.lane.b32.xlu0 %v343, 124
        %v389 = vpop.permute.xlu0 %388
        %390 = vrot.lane.b32.xlu0 %v344, 124
        %v391 = vpop.permute.xlu0 %390
        %392 = vrot.lane.b32.xlu0 %v345, 124
        %v393 = vpop.permute.xlu0 %392
        %402 = vrot.lane.b32.xlu0 %v338, 122
        %v403 = vpop.permute.xlu0 %402
        %404 = vrot.lane.b32.xlu0 %v339, 122
        %v405 = vpop.permute.xlu0 %404
        %406 = vrot.lane.b32.xlu0 %v340, 122
        %v407 = vpop.permute.xlu0 %406
        %408 = vrot.lane.b32.xlu0 %v341, 122
        %v409 = vpop.permute.xlu0 %408
        %410 = vrot.lane.b32.xlu0 %v342, 122
        %v411 = vpop.permute.xlu0 %410
        %412 = vrot.lane.b32.xlu0 %v343, 122
        %v413 = vpop.permute.xlu0 %412
        %414 = vrot.lane.b32.xlu0 %v344, 122
        %v415 = vpop.permute.xlu0 %414
        %416 = vrot.lane.b32.xlu0 %v345, 122
        %v417 = vpop.permute.xlu0 %416
        %426 = vrot.lane.b32.xlu0 %v338, 120
        %v427 = vpop.permute.xlu0 %426
        %428 = vrot.lane.b32.xlu0 %v339, 120
        %v429 = vpop.permute.xlu0 %428
        %430 = vrot.lane.b32.xlu0 %v340, 120
        %v431 = vpop.permute.xlu0 %430
        %432 = vrot.lane.b32.xlu0 %v341, 120
        %v433 = vpop.permute.xlu0 %432
        %434 = vrot.lane.b32.xlu0 %v342, 120
        %v435 = vpop.permute.xlu0 %434
        %436 = vrot.lane.b32.xlu0 %v343, 120
        %v437 = vpop.permute.xlu0 %436
        %438 = vrot.lane.b32.xlu0 %v344, 120
        %v439 = vpop.permute.xlu0 %438
        %440 = vrot.lane.b32.xlu0 %v345, 120
        %v441 = vpop.permute.xlu0 %440
        %450 = vrot.lane.b32.xlu0 %v338, 118
        %v451 = vpop.permute.xlu0 %450
        %452 = vrot.lane.b32.xlu0 %v339, 118
        %v453 = vpop.permute.xlu0 %452
        %454 = vrot.lane.b32.xlu0 %v340, 118
        %v455 = vpop.permute.xlu0 %454
        %456 = vrot.lane.b32.xlu0 %v341, 118
        %v457 = vpop.permute.xlu0 %456
        %458 = vrot.lane.b32.xlu0 %v342, 118
        %v459 = vpop.permute.xlu0 %458
        %460 = vrot.lane.b32.xlu0 %v343, 118
        %v461 = vpop.permute.xlu0 %460
        %462 = vrot.lane.b32.xlu0 %v344, 118
        %v463 = vpop.permute.xlu0 %462
        %464 = vrot.lane.b32.xlu0 %v345, 118
        %v465 = vpop.permute.xlu0 %464
        %474 = vrot.lane.b32.xlu0 %v338, 116
        %v475 = vpop.permute.xlu0 %474
        %476 = vrot.lane.b32.xlu0 %v339, 116
        %v477 = vpop.permute.xlu0 %476
        %478 = vrot.lane.b32.xlu0 %v340, 116
        %v479 = vpop.permute.xlu0 %478
        %480 = vrot.lane.b32.xlu0 %v341, 116
        %v481 = vpop.permute.xlu0 %480
        %482 = vrot.lane.b32.xlu0 %v342, 116
        %v483 = vpop.permute.xlu0 %482
        %484 = vrot.lane.b32.xlu0 %v343, 116
        %v485 = vpop.permute.xlu0 %484
        %486 = vrot.lane.b32.xlu0 %v344, 116
        %v487 = vpop.permute.xlu0 %486
        %488 = vrot.lane.b32.xlu0 %v345, 116
        %v489 = vpop.permute.xlu0 %488
        %v498 = vld [vmem:[%s1] sm:$0xff]
        %v499 = vld [vmem:[%s1 + $0x8] sm:$0xff]
        %vm500 = vcmask 457728
        %v502 = vsel %vm500, %v498, 0
        %v505 = vsel %vm500, %v499, 0
        %507 = vmatprep.subr.mxu0 0.0
        %508 = vmatpush1.msra.mxu0 %v338
        %509 = vmatprep.subr.mxu0 0.0
        %510 = vmatpush1.msra.mxu0 %v355
        %511 = vmatprep.subr.mxu0 0.0
        %512 = vmatpush1.msra.mxu0 %v379
        %513 = vmatprep.subr.mxu0 0.0
        %514 = vmatpush1.msra.mxu0 %v403
        %515 = vmatprep.subr.mxu0 0.0
        %516 = vmatpush1.msra.mxu0 %v427
        %517 = vmatprep.subr.mxu0 0.0
        %518 = vmatpush1.msra.mxu0 %v451
        %519 = vmatprep.subr.mxu0 0.0
        %520 = vmatpush1.msra.mxu0 %v475
        %521 = vmatprep.subr.mxu0 0.0
        %522 = vmatpush1.msra.mxu0 0.0
        %523 = vmatprep.subr.mxu0 0.0
        %524 = vmatpush1.msra.mxu0 0.0
        %525 = vmatprep.subr.mxu0 0.0
        %526 = vmatpush1.msra.mxu0 0.0
        %527 = vmatprep.subr.mxu0 0.0
        %528 = vmatpush1.msra.mxu0 0.0
        %529 = vmatprep.subr.mxu0 0.0
        %530 = vmatpush1.msra.mxu0 0.0
        %531 = vmatprep.subr.mxu0 0.0
        %532 = vmatpush1.msra.mxu0 0.0
        %533 = vmatprep.subr.mxu0 0.0
        %534 = vmatpush1.msra.mxu0 0.0
        %535 = vmatprep.subr.mxu0 0.0
        %536 = vmatpush1.msra.mxu0 0.0
        %537 = vmatprep.subr.mxu0 0.0
        %538 = vmatpush1.msra.mxu0 0.0
        %539 = vmatprep.subr.mxu0 0.0
        %540 = vmatpush1.msra.mxu0 0.0
        %541 = vmatprep.subr.mxu0 0.0
        %542 = vmatpush1.msra.mxu0 0.0
        %543 = vmatprep.subr.mxu0 0.0
        %544 = vmatpush1.msra.mxu0 0.0
        %545 = vmatprep.subr.mxu0 0.0
        %546 = vmatpush1.msra.mxu0 0.0
        %547 = vmatprep.subr.mxu0 0.0
        %548 = vmatpush1.msra.mxu0 0.0
        %549 = vmatprep.subr.mxu0 0.0
        %550 = vmatpush1.msra.mxu0 0.0
        %551 = vmatprep.subr.mxu0 0.0
        %552 = vmatpush1.msra.mxu0 0.0
        %553 = vmatprep.subr.mxu0 0.0
        %554 = vmatpush1.msra.mxu0 0.0
        %555 = vmatprep.subr.mxu0 0.0
        %556 = vmatpush1.msra.mxu0 0.0
        %557 = vmatprep.subr.mxu0 0.0
        %558 = vmatpush1.msra.mxu0 0.0
        %559 = vmatprep.subr.mxu0 0.0
        %560 = vmatpush1.msra.mxu0 0.0
        %561 = vmatprep.subr.mxu0 0.0
        %562 = vmatpush1.msra.mxu0 0.0
        %563 = vmatprep.subr.mxu0 0.0
        %564 = vmatpush1.msra.mxu0 0.0
        %565 = vmatprep.subr.mxu0 0.0
        %566 = vmatpush1.msra.mxu0 0.0
        %567 = vmatprep.subr.mxu0 0.0
        %568 = vmatpush1.msra.mxu0 0.0
        %569 = vmatprep.subr.mxu0 0.0
        %570 = vmatpush1.msra.mxu0 0.0
        %571 = vmatprep.mubr.f32.mxu0 0.0
        %572 = vmatmul.mubr.f32.gmra.mrb[0].mxu0 %v502
        %v573 = vpop.f32.mrb[0].mxu0
        %v574 = vadd.f32 0.0, %v573
        %v575 = vpop.f32.mrb[0].mxu0
        %576 = vmatprep.mubr.f32.mxu0 0.0
        %577 = vmatmul.mubr.f32.gmra.mrb[0].mxu0 %v505
        %v578 = vpop.f32.mrb[0].mxu0
        %v579 = vadd.f32 0.0, %v578
        %v580 = vpop.f32.mrb[0].mxu0
        %581 = vdwg.mxu0
        %582 = vmatprep.subr.mxu0 0.0
        %583 = vmatpush1.msra.mxu0 %v339
        %584 = vmatprep.subr.mxu0 0.0
        %585 = vmatpush1.msra.mxu0 %v357
        %586 = vmatprep.subr.mxu0 0.0
        %587 = vmatpush1.msra.mxu0 %v381
        %588 = vmatprep.subr.mxu0 0.0
        %589 = vmatpush1.msra.mxu0 %v405
        %590 = vmatprep.subr.mxu0 0.0
        %591 = vmatpush1.msra.mxu0 %v429
        %592 = vmatprep.subr.mxu0 0.0
        %593 = vmatpush1.msra.mxu0 %v453
        %594 = vmatprep.subr.mxu0 0.0
        %595 = vmatpush1.msra.mxu0 %v477
        %596 = vmatprep.subr.mxu0 0.0
        %597 = vmatpush1.msra.mxu0 0.0
        %598 = vmatprep.subr.mxu0 0.0
        %599 = vmatpush1.msra.mxu0 0.0
        %600 = vmatprep.subr.mxu0 0.0
        %601 = vmatpush1.msra.mxu0 0.0
        %602 = vmatprep.subr.mxu0 0.0
        %603 = vmatpush1.msra.mxu0 0.0
        %604 = vmatprep.subr.mxu0 0.0
        %605 = vmatpush1.msra.mxu0 0.0
        %606 = vmatprep.subr.mxu0 0.0
        %607 = vmatpush1.msra.mxu0 0.0
        %608 = vmatprep.subr.mxu0 0.0
        %609 = vmatpush1.msra.mxu0 0.0
        %610 = vmatprep.subr.mxu0 0.0
        %611 = vmatpush1.msra.mxu0 0.0
        %612 = vmatprep.subr.mxu0 0.0
        %613 = vmatpush1.msra.mxu0 0.0
        %614 = vmatprep.subr.mxu0 0.0
        %615 = vmatpush1.msra.mxu0 0.0
        %616 = vmatprep.subr.mxu0 0.0
        %617 = vmatpush1.msra.mxu0 0.0
        %618 = vmatprep.subr.mxu0 0.0
        %619 = vmatpush1.msra.mxu0 0.0
        %620 = vmatprep.subr.mxu0 0.0
        %621 = vmatpush1.msra.mxu0 0.0
        %622 = vmatprep.subr.mxu0 0.0
        %623 = vmatpush1.msra.mxu0 0.0
        %624 = vmatprep.subr.mxu0 0.0
        %625 = vmatpush1.msra.mxu0 0.0
        %626 = vmatprep.subr.mxu0 0.0
        %627 = vmatpush1.msra.mxu0 0.0
        %628 = vmatprep.subr.mxu0 0.0
        %629 = vmatpush1.msra.mxu0 0.0
        %630 = vmatprep.subr.mxu0 0.0
        %631 = vmatpush1.msra.mxu0 0.0
        %632 = vmatprep.subr.mxu0 0.0
        %633 = vmatpush1.msra.mxu0 0.0
        %634 = vmatprep.subr.mxu0 0.0
        %635 = vmatpush1.msra.mxu0 0.0
        %636 = vmatprep.subr.mxu0 0.0
        %637 = vmatpush1.msra.mxu0 0.0
        %638 = vmatprep.subr.mxu0 0.0
        %639 = vmatpush1.msra.mxu0 0.0
        %640 = vmatprep.subr.mxu0 0.0
        %641 = vmatpush1.msra.mxu0 0.0
        %642 = vmatprep.subr.mxu0 0.0
        %643 = vmatpush1.msra.mxu0 0.0
        %644 = vmatprep.subr.mxu0 0.0
        %645 = vmatpush1.msra.mxu0 0.0
        %646 = vmatprep.mubr.f32.mxu0 0.0
        %647 = vmatmul.mubr.f32.gmra.mrb[0].mxu0 %v502
        %v648 = vpop.f32.mrb[0].mxu0
        %v649 = vadd.f32 0.0, %v648
        %v650 = vpop.f32.mrb[0].mxu0
        %651 = vmatprep.mubr.f32.mxu0 0.0
        %652 = vmatmul.mubr.f32.gmra.mrb[0].mxu0 %v505
        %v653 = vpop.f32.mrb[0].mxu0
        %v654 = vadd.f32 0.0, %v653
        %v655 = vpop.f32.mrb[0].mxu0
        %656 = vdwg.mxu0
        %657 = vmatprep.subr.mxu0 0.0
        %658 = vmatpush1.msra.mxu0 %v340
        %659 = vmatprep.subr.mxu0 0.0
        %660 = vmatpush1.msra.mxu0 %v359
        %661 = vmatprep.subr.mxu0 0.0
        %662 = vmatpush1.msra.mxu0 %v383
        %663 = vmatprep.subr.mxu0 0.0
        %664 = vmatpush1.msra.mxu0 %v407
        %665 = vmatprep.subr.mxu0 0.0
        %666 = vmatpush1.msra.mxu0 %v431
        %667 = vmatprep.subr.mxu0 0.0
        %668 = vmatpush1.msra.mxu0 %v455
        %669 = vmatprep.subr.mxu0 0.0
        %670 = vmatpush1.msra.mxu0 %v479
        %671 = vmatprep.subr.mxu0 0.0
        %672 = vmatpush1.msra.mxu0 0.0
        %673 = vmatprep.subr.mxu0 0.0
        %674 = vmatpush1.msra.mxu0 0.0
        %675 = vmatprep.subr.mxu0 0.0
        %676 = vmatpush1.msra.mxu0 0.0
        %677 = vmatprep.subr.mxu0 0.0
        %678 = vmatpush1.msra.mxu0 0.0
        %679 = vmatprep.subr.mxu0 0.0
        %680 = vmatpush1.msra.mxu0 0.0
        %681 = vmatprep.subr.mxu0 0.0
        %682 = vmatpush1.msra.mxu0 0.0
        %683 = vmatprep.subr.mxu0 0.0
        %684 = vmatpush1.msra.mxu0 0.0
        %685 = vmatprep.subr.mxu0 0.0
        %686 = vmatpush1.msra.mxu0 0.0
        %687 = vmatprep.subr.mxu0 0.0
        %688 = vmatpush1.msra.mxu0 0.0
        %689 = vmatprep.subr.mxu0 0.0
        %690 = vmatpush1.msra.mxu0 0.0
        %691 = vmatprep.subr.mxu0 0.0
        %692 = vmatpush1.msra.mxu0 0.0
        %693 = vmatprep.subr.mxu0 0.0
        %694 = vmatpush1.msra.mxu0 0.0
        %695 = vmatprep.subr.mxu0 0.0
        %696 = vmatpush1.msra.mxu0 0.0
        %697 = vmatprep.subr.mxu0 0.0
        %698 = vmatpush1.msra.mxu0 0.0
        %699 = vmatprep.subr.mxu0 0.0
        %700 = vmatpush1.msra.mxu0 0.0
        %701 = vmatprep.subr.mxu0 0.0
        %702 = vmatpush1.msra.mxu0 0.0
        %703 = vmatprep.subr.mxu0 0.0
        %704 = vmatpush1.msra.mxu0 0.0
        %705 = vmatprep.subr.mxu0 0.0
        %706 = vmatpush1.msra.mxu0 0.0
        %707 = vmatprep.subr.mxu0 0.0
        %708 = vmatpush1.msra.mxu0 0.0
        %709 = vmatprep.subr.mxu0 0.0
        %710 = vmatpush1.msra.mxu0 0.0
        %711 = vmatprep.subr.mxu0 0.0
        %712 = vmatpush1.msra.mxu0 0.0
        %713 = vmatprep.subr.mxu0 0.0
        %714 = vmatpush1.msra.mxu0 0.0
        %715 = vmatprep.subr.mxu0 0.0
        %716 = vmatpush1.msra.mxu0 0.0
        %717 = vmatprep.subr.mxu0 0.0
        %718 = vmatpush1.msra.mxu0 0.0
        %719 = vmatprep.subr.mxu0 0.0
        %720 = vmatpush1.msra.mxu0 0.0
        %721 = vmatprep.mubr.f32.mxu0 0.0
        %722 = vmatmul.mubr.f32.gmra.mrb[0].mxu0 %v502
        %v723 = vpop.f32.mrb[0].mxu0
        %v724 = vadd.f32 0.0, %v723
        %v725 = vpop.f32.mrb[0].mxu0
        %726 = vmatprep.mubr.f32.mxu0 0.0
        %727 = vmatmul.mubr.f32.gmra.mrb[0].mxu0 %v505
        %v728 = vpop.f32.mrb[0].mxu0
        %v729 = vadd.f32 0.0, %v728
        %v730 = vpop.f32.mrb[0].mxu0
        %731 = vdwg.mxu0
        %732 = vmatprep.subr.mxu0 0.0
        %733 = vmatpush1.msra.mxu0 %v341
        %734 = vmatprep.subr.mxu0 0.0
        %735 = vmatpush1.msra.mxu0 %v361
        %736 = vmatprep.subr.mxu0 0.0
        %737 = vmatpush1.msra.mxu0 %v385
        %738 = vmatprep.subr.mxu0 0.0
        %739 = vmatpush1.msra.mxu0 %v409
        %740 = vmatprep.subr.mxu0 0.0
        %741 = vmatpush1.msra.mxu0 %v433
        %742 = vmatprep.subr.mxu0 0.0
        %743 = vmatpush1.msra.mxu0 %v457
        %744 = vmatprep.subr.mxu0 0.0
        %745 = vmatpush1.msra.mxu0 %v481
        %746 = vmatprep.subr.mxu0 0.0
        %747 = vmatpush1.msra.mxu0 0.0
        %748 = vmatprep.subr.mxu0 0.0
        %749 = vmatpush1.msra.mxu0 0.0
        %750 = vmatprep.subr.mxu0 0.0
        %751 = vmatpush1.msra.mxu0 0.0
        %752 = vmatprep.subr.mxu0 0.0
        %753 = vmatpush1.msra.mxu0 0.0
        %754 = vmatprep.subr.mxu0 0.0
        %755 = vmatpush1.msra.mxu0 0.0
        %756 = vmatprep.subr.mxu0 0.0
        %757 = vmatpush1.msra.mxu0 0.0
        %758 = vmatprep.subr.mxu0 0.0
        %759 = vmatpush1.msra.mxu0 0.0
        %760 = vmatprep.subr.mxu0 0.0
        %761 = vmatpush1.msra.mxu0 0.0
        %762 = vmatprep.subr.mxu0 0.0
        %763 = vmatpush1.msra.mxu0 0.0
        %764 = vmatprep.subr.mxu0 0.0
        %765 = vmatpush1.msra.mxu0 0.0
        %766 = vmatprep.subr.mxu0 0.0
        %767 = vmatpush1.msra.mxu0 0.0
        %768 = vmatprep.subr.mxu0 0.0
        %769 = vmatpush1.msra.mxu0 0.0
        %770 = vmatprep.subr.mxu0 0.0
        %771 = vmatpush1.msra.mxu0 0.0
        %772 = vmatprep.subr.mxu0 0.0
        %773 = vmatpush1.msra.mxu0 0.0
        %774 = vmatprep.subr.mxu0 0.0
        %775 = vmatpush1.msra.mxu0 0.0
        %776 = vmatprep.subr.mxu0 0.0
        %777 = vmatpush1.msra.mxu0 0.0
        %778 = vmatprep.subr.mxu0 0.0
        %779 = vmatpush1.msra.mxu0 0.0
        %780 = vmatprep.subr.mxu0 0.0
        %781 = vmatpush1.msra.mxu0 0.0
        %782 = vmatprep.subr.mxu0 0.0
        %783 = vmatpush1.msra.mxu0 0.0
        %784 = vmatprep.subr.mxu0 0.0
        %785 = vmatpush1.msra.mxu0 0.0
        %786 = vmatprep.subr.mxu0 0.0
        %787 = vmatpush1.msra.mxu0 0.0
        %788 = vmatprep.subr.mxu0 0.0
        %789 = vmatpush1.msra.mxu0 0.0
        %790 = vmatprep.subr.mxu0 0.0
        %791 = vmatpush1.msra.mxu0 0.0
        %792 = vmatprep.subr.mxu0 0.0
        %793 = vmatpush1.msra.mxu0 0.0
        %794 = vmatprep.subr.mxu0 0.0
        %795 = vmatpush1.msra.mxu0 0.0
        %796 = vmatprep.mubr.f32.mxu0 0.0
        %797 = vmatmul.mubr.f32.gmra.mrb[0].mxu0 %v502
        %v798 = vpop.f32.mrb[0].mxu0
        %v799 = vadd.f32 0.0, %v798
        %v800 = vpop.f32.mrb[0].mxu0
        %801 = vmatprep.mubr.f32.mxu0 0.0
        %802 = vmatmul.mubr.f32.gmra.mrb[0].mxu0 %v505
        %v803 = vpop.f32.mrb[0].mxu0
        %v804 = vadd.f32 0.0, %v803
        %v805 = vpop.f32.mrb[0].mxu0
        %806 = vdwg.mxu0
        %807 = vmatprep.subr.mxu0 0.0
        %808 = vmatpush1.msra.mxu0 %v342
        %809 = vmatprep.subr.mxu0 0.0
        %810 = vmatpush1.msra.mxu0 %v363
        %811 = vmatprep.subr.mxu0 0.0
        %812 = vmatpush1.msra.mxu0 %v387
        %813 = vmatprep.subr.mxu0 0.0
        %814 = vmatpush1.msra.mxu0 %v411
        %815 = vmatprep.subr.mxu0 0.0
        %816 = vmatpush1.msra.mxu0 %v435
        %817 = vmatprep.subr.mxu0 0.0
        %818 = vmatpush1.msra.mxu0 %v459
        %819 = vmatprep.subr.mxu0 0.0
        %820 = vmatpush1.msra.mxu0 %v483
        %821 = vmatprep.subr.mxu0 0.0
        %822 = vmatpush1.msra.mxu0 0.0
        %823 = vmatprep.subr.mxu0 0.0
        %824 = vmatpush1.msra.mxu0 0.0
        %825 = vmatprep.subr.mxu0 0.0
        %826 = vmatpush1.msra.mxu0 0.0
        %827 = vmatprep.subr.mxu0 0.0
        %828 = vmatpush1.msra.mxu0 0.0
        %829 = vmatprep.subr.mxu0 0.0
        %830 = vmatpush1.msra.mxu0 0.0
        %831 = vmatprep.subr.mxu0 0.0
        %832 = vmatpush1.msra.mxu0 0.0
        %833 = vmatprep.subr.mxu0 0.0
        %834 = vmatpush1.msra.mxu0 0.0
        %835 = vmatprep.subr.mxu0 0.0
        %836 = vmatpush1.msra.mxu0 0.0
        %837 = vmatprep.subr.mxu0 0.0
        %838 = vmatpush1.msra.mxu0 0.0
        %839 = vmatprep.subr.mxu0 0.0
        %840 = vmatpush1.msra.mxu0 0.0
        %841 = vmatprep.subr.mxu0 0.0
        %842 = vmatpush1.msra.mxu0 0.0
        %843 = vmatprep.subr.mxu0 0.0
        %844 = vmatpush1.msra.mxu0 0.0
        %845 = vmatprep.subr.mxu0 0.0
        %846 = vmatpush1.msra.mxu0 0.0
        %847 = vmatprep.subr.mxu0 0.0
        %848 = vmatpush1.msra.mxu0 0.0
        %849 = vmatprep.subr.mxu0 0.0
        %850 = vmatpush1.msra.mxu0 0.0
        %851 = vmatprep.subr.mxu0 0.0
        %852 = vmatpush1.msra.mxu0 0.0
        %853 = vmatprep.subr.mxu0 0.0
        %854 = vmatpush1.msra.mxu0 0.0
        %855 = vmatprep.subr.mxu0 0.0
        %856 = vmatpush1.msra.mxu0 0.0
        %857 = vmatprep.subr.mxu0 0.0
        %858 = vmatpush1.msra.mxu0 0.0
        %859 = vmatprep.subr.mxu0 0.0
        %860 = vmatpush1.msra.mxu0 0.0
        %861 = vmatprep.subr.mxu0 0.0
        %862 = vmatpush1.msra.mxu0 0.0
        %863 = vmatprep.subr.mxu0 0.0
        %864 = vmatpush1.msra.mxu0 0.0
        %865 = vmatprep.subr.mxu0 0.0
        %866 = vmatpush1.msra.mxu0 0.0
        %867 = vmatprep.subr.mxu0 0.0
        %868 = vmatpush1.msra.mxu0 0.0
        %869 = vmatprep.subr.mxu0 0.0
        %870 = vmatpush1.msra.mxu0 0.0
        %871 = vmatprep.mubr.f32.mxu0 0.0
        %872 = vmatmul.mubr.f32.gmra.mrb[0].mxu0 %v502
        %v873 = vpop.f32.mrb[0].mxu0
        %v874 = vadd.f32 0.0, %v873
        %v875 = vpop.f32.mrb[0].mxu0
        %876 = vmatprep.mubr.f32.mxu0 0.0
        %877 = vmatmul.mubr.f32.gmra.mrb[0].mxu0 %v505
        %v878 = vpop.f32.mrb[0].mxu0
        %v879 = vadd.f32 0.0, %v878
        %v880 = vpop.f32.mrb[0].mxu0
        %881 = vdwg.mxu0
        %882 = vmatprep.subr.mxu0 0.0
        %883 = vmatpush1.msra.mxu0 %v343
        %884 = vmatprep.subr.mxu0 0.0
        %885 = vmatpush1.msra.mxu0 %v365
        %886 = vmatprep.subr.mxu0 0.0
        %887 = vmatpush1.msra.mxu0 %v389
        %888 = vmatprep.subr.mxu0 0.0
        %889 = vmatpush1.msra.mxu0 %v413
        %890 = vmatprep.subr.mxu0 0.0
        %891 = vmatpush1.msra.mxu0 %v437
        %892 = vmatprep.subr.mxu0 0.0
        %893 = vmatpush1.msra.mxu0 %v461
        %894 = vmatprep.subr.mxu0 0.0
        %895 = vmatpush1.msra.mxu0 %v485
        %896 = vmatprep.subr.mxu0 0.0
        %897 = vmatpush1.msra.mxu0 0.0
        %898 = vmatprep.subr.mxu0 0.0
        %899 = vmatpush1.msra.mxu0 0.0
        %900 = vmatprep.subr.mxu0 0.0
        %901 = vmatpush1.msra.mxu0 0.0
        %902 = vmatprep.subr.mxu0 0.0
        %903 = vmatpush1.msra.mxu0 0.0
        %904 = vmatprep.subr.mxu0 0.0
        %905 = vmatpush1.msra.mxu0 0.0
        %906 = vmatprep.subr.mxu0 0.0
        %907 = vmatpush1.msra.mxu0 0.0
        %908 = vmatprep.subr.mxu0 0.0
        %909 = vmatpush1.msra.mxu0 0.0
        %910 = vmatprep.subr.mxu0 0.0
        %911 = vmatpush1.msra.mxu0 0.0
        %912 = vmatprep.subr.mxu0 0.0
        %913 = vmatpush1.msra.mxu0 0.0
        %914 = vmatprep.subr.mxu0 0.0
        %915 = vmatpush1.msra.mxu0 0.0
        %916 = vmatprep.subr.mxu0 0.0
        %917 = vmatpush1.msra.mxu0 0.0
        %918 = vmatprep.subr.mxu0 0.0
        %919 = vmatpush1.msra.mxu0 0.0
        %920 = vmatprep.subr.mxu0 0.0
        %921 = vmatpush1.msra.mxu0 0.0
        %922 = vmatprep.subr.mxu0 0.0
        %923 = vmatpush1.msra.mxu0 0.0
        %924 = vmatprep.subr.mxu0 0.0
        %925 = vmatpush1.msra.mxu0 0.0
        %926 = vmatprep.subr.mxu0 0.0
        %927 = vmatpush1.msra.mxu0 0.0
        %928 = vmatprep.subr.mxu0 0.0
        %929 = vmatpush1.msra.mxu0 0.0
        %930 = vmatprep.subr.mxu0 0.0
        %931 = vmatpush1.msra.mxu0 0.0
        %932 = vmatprep.subr.mxu0 0.0
        %933 = vmatpush1.msra.mxu0 0.0
        %934 = vmatprep.subr.mxu0 0.0
        %935 = vmatpush1.msra.mxu0 0.0
        %936 = vmatprep.subr.mxu0 0.0
        %937 = vmatpush1.msra.mxu0 0.0
        %938 = vmatprep.subr.mxu0 0.0
        %939 = vmatpush1.msra.mxu0 0.0
        %940 = vmatprep.subr.mxu0 0.0
        %941 = vmatpush1.msra.mxu0 0.0
        %942 = vmatprep.subr.mxu0 0.0
        %943 = vmatpush1.msra.mxu0 0.0
        %944 = vmatprep.subr.mxu0 0.0
        %945 = vmatpush1.msra.mxu0 0.0
        %946 = vmatprep.mubr.f32.mxu0 0.0
        %947 = vmatmul.mubr.f32.gmra.mrb[0].mxu0 %v502
        %v948 = vpop.f32.mrb[0].mxu0
        %v949 = vadd.f32 0.0, %v948
        %v950 = vpop.f32.mrb[0].mxu0
        %951 = vmatprep.mubr.f32.mxu0 0.0
        %952 = vmatmul.mubr.f32.gmra.mrb[0].mxu0 %v505
        %v953 = vpop.f32.mrb[0].mxu0
        %v954 = vadd.f32 0.0, %v953
        %v955 = vpop.f32.mrb[0].mxu0
        %956 = vdwg.mxu0
        %957 = vmatprep.subr.mxu0 0.0
        %958 = vmatpush1.msra.mxu0 %v344
        %959 = vmatprep.subr.mxu0 0.0
        %960 = vmatpush1.msra.mxu0 %v367
        %961 = vmatprep.subr.mxu0 0.0
        %962 = vmatpush1.msra.mxu0 %v391
        %963 = vmatprep.subr.mxu0 0.0
        %964 = vmatpush1.msra.mxu0 %v415
        %965 = vmatprep.subr.mxu0 0.0
        %966 = vmatpush1.msra.mxu0 %v439
        %967 = vmatprep.subr.mxu0 0.0
        %968 = vmatpush1.msra.mxu0 %v463
        %969 = vmatprep.subr.mxu0 0.0
        %970 = vmatpush1.msra.mxu0 %v487
        %971 = vmatprep.subr.mxu0 0.0
        %972 = vmatpush1.msra.mxu0 0.0
        %973 = vmatprep.subr.mxu0 0.0
        %974 = vmatpush1.msra.mxu0 0.0
        %975 = vmatprep.subr.mxu0 0.0
        %976 = vmatpush1.msra.mxu0 0.0
        %977 = vmatprep.subr.mxu0 0.0
        %978 = vmatpush1.msra.mxu0 0.0
        %979 = vmatprep.subr.mxu0 0.0
        %980 = vmatpush1.msra.mxu0 0.0
        %981 = vmatprep.subr.mxu0 0.0
        %982 = vmatpush1.msra.mxu0 0.0
        %983 = vmatprep.subr.mxu0 0.0
        %984 = vmatpush1.msra.mxu0 0.0
        %985 = vmatprep.subr.mxu0 0.0
        %986 = vmatpush1.msra.mxu0 0.0
        %987 = vmatprep.subr.mxu0 0.0
        %988 = vmatpush1.msra.mxu0 0.0
        %989 = vmatprep.subr.mxu0 0.0
        %990 = vmatpush1.msra.mxu0 0.0
        %991 = vmatprep.subr.mxu0 0.0
        %992 = vmatpush1.msra.mxu0 0.0
        %993 = vmatprep.subr.mxu0 0.0
        %994 = vmatpush1.msra.mxu0 0.0
        %995 = vmatprep.subr.mxu0 0.0
        %996 = vmatpush1.msra.mxu0 0.0
        %997 = vmatprep.subr.mxu0 0.0
        %998 = vmatpush1.msra.mxu0 0.0
        %999 = vmatprep.subr.mxu0 0.0
        %1000 = vmatpush1.msra.mxu0 0.0
        %1001 = vmatprep.subr.mxu0 0.0
        %1002 = vmatpush1.msra.mxu0 0.0
        %1003 = vmatprep.subr.mxu0 0.0
        %1004 = vmatpush1.msra.mxu0 0.0
        %1005 = vmatprep.subr.mxu0 0.0
        %1006 = vmatpush1.msra.mxu0 0.0
        %1007 = vmatprep.subr.mxu0 0.0
        %1008 = vmatpush1.msra.mxu0 0.0
        %1009 = vmatprep.subr.mxu0 0.0
        %1010 = vmatpush1.msra.mxu0 0.0
        %1011 = vmatprep.subr.mxu0 0.0
        %1012 = vmatpush1.msra.mxu0 0.0
        %1013 = vmatprep.subr.mxu0 0.0
        %1014 = vmatpush1.msra.mxu0 0.0
        %1015 = vmatprep.subr.mxu0 0.0
        %1016 = vmatpush1.msra.mxu0 0.0
        %1017 = vmatprep.subr.mxu0 0.0
        %1018 = vmatpush1.msra.mxu0 0.0
        %1019 = vmatprep.subr.mxu0 0.0
        %1020 = vmatpush1.msra.mxu0 0.0
        %1021 = vmatprep.mubr.f32.mxu0 0.0
        %1022 = vmatmul.mubr.f32.gmra.mrb[0].mxu0 %v502
        %v1023 = vpop.f32.mrb[0].mxu0
        %v1024 = vadd.f32 0.0, %v1023
        %v1025 = vpop.f32.mrb[0].mxu0
        %1026 = vmatprep.mubr.f32.mxu0 0.0
        %1027 = vmatmul.mubr.f32.gmra.mrb[0].mxu0 %v505
        %v1028 = vpop.f32.mrb[0].mxu0
        %v1029 = vadd.f32 0.0, %v1028
        %v1030 = vpop.f32.mrb[0].mxu0
        %1031 = vdwg.mxu0
        %1032 = vmatprep.subr.mxu0 0.0
        %1033 = vmatpush1.msra.mxu0 %v345
        %1034 = vmatprep.subr.mxu0 0.0
        %1035 = vmatpush1.msra.mxu0 %v369
        %1036 = vmatprep.subr.mxu0 0.0
        %1037 = vmatpush1.msra.mxu0 %v393
        %1038 = vmatprep.subr.mxu0 0.0
        %1039 = vmatpush1.msra.mxu0 %v417
        %1040 = vmatprep.subr.mxu0 0.0
        %1041 = vmatpush1.msra.mxu0 %v441
        %1042 = vmatprep.subr.mxu0 0.0
        %1043 = vmatpush1.msra.mxu0 %v465
        %1044 = vmatprep.subr.mxu0 0.0
        %1045 = vmatpush1.msra.mxu0 %v489
        %1046 = vmatprep.subr.mxu0 0.0
        %1047 = vmatpush1.msra.mxu0 0.0
        %1048 = vmatprep.subr.mxu0 0.0
        %1049 = vmatpush1.msra.mxu0 0.0
        %1050 = vmatprep.subr.mxu0 0.0
        %1051 = vmatpush1.msra.mxu0 0.0
        %1052 = vmatprep.subr.mxu0 0.0
        %1053 = vmatpush1.msra.mxu0 0.0
        %1054 = vmatprep.subr.mxu0 0.0
        %1055 = vmatpush1.msra.mxu0 0.0
        %1056 = vmatprep.subr.mxu0 0.0
        %1057 = vmatpush1.msra.mxu0 0.0
        %1058 = vmatprep.subr.mxu0 0.0
        %1059 = vmatpush1.msra.mxu0 0.0
        %1060 = vmatprep.subr.mxu0 0.0
        %1061 = vmatpush1.msra.mxu0 0.0
        %1062 = vmatprep.subr.mxu0 0.0
        %1063 = vmatpush1.msra.mxu0 0.0
        %1064 = vmatprep.subr.mxu0 0.0
        %1065 = vmatpush1.msra.mxu0 0.0
        %1066 = vmatprep.subr.mxu0 0.0
        %1067 = vmatpush1.msra.mxu0 0.0
        %1068 = vmatprep.subr.mxu0 0.0
        %1069 = vmatpush1.msra.mxu0 0.0
        %1070 = vmatprep.subr.mxu0 0.0
        %1071 = vmatpush1.msra.mxu0 0.0
        %1072 = vmatprep.subr.mxu0 0.0
        %1073 = vmatpush1.msra.mxu0 0.0
        %1074 = vmatprep.subr.mxu0 0.0
        %1075 = vmatpush1.msra.mxu0 0.0
        %1076 = vmatprep.subr.mxu0 0.0
        %1077 = vmatpush1.msra.mxu0 0.0
        %1078 = vmatprep.subr.mxu0 0.0
        %1079 = vmatpush1.msra.mxu0 0.0
        %1080 = vmatprep.subr.mxu0 0.0
        %1081 = vmatpush1.msra.mxu0 0.0
        %1082 = vmatprep.subr.mxu0 0.0
        %1083 = vmatpush1.msra.mxu0 0.0
        %1084 = vmatprep.subr.mxu0 0.0
        %1085 = vmatpush1.msra.mxu0 0.0
        %1086 = vmatprep.subr.mxu0 0.0
        %1087 = vmatpush1.msra.mxu0 0.0
        %1088 = vmatprep.subr.mxu0 0.0
        %1089 = vmatpush1.msra.mxu0 0.0
        %1090 = vmatprep.subr.mxu0 0.0
        %1091 = vmatpush1.msra.mxu0 0.0
        %1092 = vmatprep.subr.mxu0 0.0
        %1093 = vmatpush1.msra.mxu0 0.0
        %1094 = vmatprep.subr.mxu0 0.0
        %1095 = vmatpush1.msra.mxu0 0.0
        %1096 = vmatprep.mubr.f32.mxu0 0.0
        %1097 = vmatmul.mubr.f32.gmra.mrb[0].mxu0 %v502
        %v1098 = vpop.f32.mrb[0].mxu0
        %v1099 = vadd.f32 0.0, %v1098
        %v1100 = vpop.f32.mrb[0].mxu0
        %1101 = vmatprep.mubr.f32.mxu0 0.0
        %1102 = vmatmul.mubr.f32.gmra.mrb[0].mxu0 %v505
        %v1103 = vpop.f32.mrb[0].mxu0
        %v1104 = vadd.f32 0.0, %v1103
        %v1105 = vpop.f32.mrb[0].mxu0
        %1106 = vdwg.mxu0
        %v1107 = vcombine.low %v574, %v724
        %v1108 = vcombine.high %v574, %v724
        %v1110 = vunpack.c.l.s4 1983009808
        %v1111 = vunpack.c.0.s8 %v1110
        %v1112 = vlaneseq
        %v1113 = vshrl.u32 %v1112, 7
        %v1114 = vsub.s32 %v1111, %v1113
        %v1115 = vrot.slane %v1107, %v1114
        %v1117 = vunpack.c.l.s4 1983009808
        %v1118 = vunpack.c.0.s8 %v1117
        %v1119 = vlaneseq
        %v1120 = vshrl.u32 %v1119, 7
        %v1121 = vsub.s32 %v1118, %v1120
        %v1122 = vrot.slane %v1108, %v1121
        %v1123 = vcombine.low %v649, %v799
        %v1124 = vcombine.high %v649, %v799
        %v1126 = vunpack.c.l.s4 1983009808
        %v1127 = vunpack.c.0.s8 %v1126
        %v1128 = vlaneseq
        %v1129 = vshrl.u32 %v1128, 7
        %v1130 = vsub.s32 %v1127, %v1129
        %v1131 = vrot.slane %v1123, %v1130
        %v1133 = vunpack.c.l.s4 1983009808
        %v1134 = vunpack.c.0.s8 %v1133
        %v1135 = vlaneseq
        %v1136 = vshrl.u32 %v1135, 7
        %v1137 = vsub.s32 %v1134, %v1136
        %v1138 = vrot.slane %v1124, %v1137
        %v1139 = vcombine.low %v874, %v1024
        %v1140 = vcombine.high %v874, %v1024
        %v1142 = vunpack.c.l.s4 1983009808
        %v1143 = vunpack.c.0.s8 %v1142
        %v1144 = vlaneseq
        %v1145 = vshrl.u32 %v1144, 7
        %v1146 = vsub.s32 %v1143, %v1145
        %v1147 = vrot.slane %v1139, %v1146
        %v1149 = vunpack.c.l.s4 1983009808
        %v1150 = vunpack.c.0.s8 %v1149
        %v1151 = vlaneseq
        %v1152 = vshrl.u32 %v1151, 7
        %v1153 = vsub.s32 %v1150, %v1152
        %v1154 = vrot.slane %v1140, %v1153
        %v1155 = vcombine.low %v949, %v1099
        %v1156 = vcombine.high %v949, %v1099
        %v1158 = vunpack.c.l.s4 1983009808
        %v1159 = vunpack.c.0.s8 %v1158
        %v1160 = vlaneseq
        %v1161 = vshrl.u32 %v1160, 7
        %v1162 = vsub.s32 %v1159, %v1161
        %v1163 = vrot.slane %v1155, %v1162
        %v1165 = vunpack.c.l.s4 1983009808
        %v1166 = vunpack.c.0.s8 %v1165
        %v1167 = vlaneseq
        %v1168 = vshrl.u32 %v1167, 7
        %v1169 = vsub.s32 %v1166, %v1168
        %v1170 = vrot.slane %v1156, %v1169
        %v1171 = vcombine.low %v1115, %v1131
        %v1172 = vcombine.high %v1115, %v1131
        %v1174 = vunpack.c.l.s4 1934713408
        %v1175 = vunpack.c.0.s8 %v1174
        %v1176 = vlaneseq
        %v1177 = vshrl.u32 %v1176, 7
        %v1178 = vsub.s32 %v1175, %v1177
        %v1179 = vrot.slane %v1171, %v1178
        %v1181 = vunpack.c.l.s4 1934713408
        %v1182 = vunpack.c.0.s8 %v1181
        %v1183 = vlaneseq
        %v1184 = vshrl.u32 %v1183, 7
        %v1185 = vsub.s32 %v1182, %v1184
        %v1186 = vrot.slane %v1172, %v1185
        %v1187 = vcombine.low %v1122, %v1138
        %v1188 = vcombine.high %v1122, %v1138
        %v1190 = vunpack.c.l.s4 1934713408
        %v1191 = vunpack.c.0.s8 %v1190
        %v1192 = vlaneseq
        %v1193 = vshrl.u32 %v1192, 7
        %v1194 = vsub.s32 %v1191, %v1193
        %v1195 = vrot.slane %v1187, %v1194
        %v1197 = vunpack.c.l.s4 1934713408
        %v1198 = vunpack.c.0.s8 %v1197
        %v1199 = vlaneseq
        %v1200 = vshrl.u32 %v1199, 7
        %v1201 = vsub.s32 %v1198, %v1200
        %v1202 = vrot.slane %v1188, %v1201
        %v1203 = vcombine.low %v1147, %v1163
        %v1204 = vcombine.high %v1147, %v1163
        %v1206 = vunpack.c.l.s4 1934713408
        %v1207 = vunpack.c.0.s8 %v1206
        %v1208 = vlaneseq
        %v1209 = vshrl.u32 %v1208, 7
        %v1210 = vsub.s32 %v1207, %v1209
        %v1211 = vrot.slane %v1203, %v1210
        %v1213 = vunpack.c.l.s4 1934713408
        %v1214 = vunpack.c.0.s8 %v1213
        %v1215 = vlaneseq
        %v1216 = vshrl.u32 %v1215, 7
        %v1217 = vsub.s32 %v1214, %v1216
        %v1218 = vrot.slane %v1204, %v1217
        %v1219 = vcombine.low %v1154, %v1170
        %v1220 = vcombine.high %v1154, %v1170
        %v1222 = vunpack.c.l.s4 1934713408
        %v1223 = vunpack.c.0.s8 %v1222
        %v1224 = vlaneseq
        %v1225 = vshrl.u32 %v1224, 7
        %v1226 = vsub.s32 %v1223, %v1225
        %v1227 = vrot.slane %v1219, %v1226
        %v1229 = vunpack.c.l.s4 1934713408
        %v1230 = vunpack.c.0.s8 %v1229
        %v1231 = vlaneseq
        %v1232 = vshrl.u32 %v1231, 7
        %v1233 = vsub.s32 %v1230, %v1232
        %v1234 = vrot.slane %v1220, %v1233
        %v1235 = vcombine.low %v1179, %v1211
        %v1236 = vcombine.high %v1179, %v1211
        %v1237 = vcombine.low %v1186, %v1218
        %v1238 = vcombine.high %v1186, %v1218
        %v1239 = vcombine.low %v1195, %v1227
        %v1240 = vcombine.high %v1195, %v1227
        %v1241 = vcombine.low %v1202, %v1234
        %v1242 = vcombine.high %v1202, %v1234
        %v1243 = vcombine.low %v579, %v729
        %v1244 = vcombine.high %v579, %v729
        %v1246 = vunpack.c.l.s4 1983009808
        %v1247 = vunpack.c.0.s8 %v1246
        %v1248 = vlaneseq
        %v1249 = vshrl.u32 %v1248, 7
        %v1250 = vsub.s32 %v1247, %v1249
        %v1251 = vrot.slane %v1243, %v1250
        %v1253 = vunpack.c.l.s4 1983009808
        %v1254 = vunpack.c.0.s8 %v1253
        %v1255 = vlaneseq
        %v1256 = vshrl.u32 %v1255, 7
        %v1257 = vsub.s32 %v1254, %v1256
        %v1258 = vrot.slane %v1244, %v1257
        %v1259 = vcombine.low %v654, %v804
        %v1260 = vcombine.high %v654, %v804
        %v1262 = vunpack.c.l.s4 1983009808
        %v1263 = vunpack.c.0.s8 %v1262
        %v1264 = vlaneseq
        %v1265 = vshrl.u32 %v1264, 7
        %v1266 = vsub.s32 %v1263, %v1265
        %v1267 = vrot.slane %v1259, %v1266
        %v1269 = vunpack.c.l.s4 1983009808
        %v1270 = vunpack.c.0.s8 %v1269
        %v1271 = vlaneseq
        %v1272 = vshrl.u32 %v1271, 7
        %v1273 = vsub.s32 %v1270, %v1272
        %v1274 = vrot.slane %v1260, %v1273
        %v1275 = vcombine.low %v879, %v1029
        %v1276 = vcombine.high %v879, %v1029
        %v1278 = vunpack.c.l.s4 1983009808
        %v1279 = vunpack.c.0.s8 %v1278
        %v1280 = vlaneseq
        %v1281 = vshrl.u32 %v1280, 7
        %v1282 = vsub.s32 %v1279, %v1281
        %v1283 = vrot.slane %v1275, %v1282
        %v1285 = vunpack.c.l.s4 1983009808
        %v1286 = vunpack.c.0.s8 %v1285
        %v1287 = vlaneseq
        %v1288 = vshrl.u32 %v1287, 7
        %v1289 = vsub.s32 %v1286, %v1288
        %v1290 = vrot.slane %v1276, %v1289
        %v1291 = vcombine.low %v954, %v1104
        %v1292 = vcombine.high %v954, %v1104
        %v1294 = vunpack.c.l.s4 1983009808
        %v1295 = vunpack.c.0.s8 %v1294
        %v1296 = vlaneseq
        %v1297 = vshrl.u32 %v1296, 7
        %v1298 = vsub.s32 %v1295, %v1297
        %v1299 = vrot.slane %v1291, %v1298
        %v1301 = vunpack.c.l.s4 1983009808
        %v1302 = vunpack.c.0.s8 %v1301
        %v1303 = vlaneseq
        %v1304 = vshrl.u32 %v1303, 7
        %v1305 = vsub.s32 %v1302, %v1304
        %v1306 = vrot.slane %v1292, %v1305
        %v1307 = vcombine.low %v1251, %v1267
        %v1308 = vcombine.high %v1251, %v1267
        %v1310 = vunpack.c.l.s4 1934713408
        %v1311 = vunpack.c.0.s8 %v1310
        %v1312 = vlaneseq
        %v1313 = vshrl.u32 %v1312, 7
        %v1314 = vsub.s32 %v1311, %v1313
        %v1315 = vrot.slane %v1307, %v1314
        %v1317 = vunpack.c.l.s4 1934713408
        %v1318 = vunpack.c.0.s8 %v1317
        %v1319 = vlaneseq
        %v1320 = vshrl.u32 %v1319, 7
        %v1321 = vsub.s32 %v1318, %v1320
        %v1322 = vrot.slane %v1308, %v1321
        %v1323 = vcombine.low %v1258, %v1274
        %v1324 = vcombine.high %v1258, %v1274
        %v1326 = vunpack.c.l.s4 1934713408
        %v1327 = vunpack.c.0.s8 %v1326
        %v1328 = vlaneseq
        %v1329 = vshrl.u32 %v1328, 7
        %v1330 = vsub.s32 %v1327, %v1329
        %v1331 = vrot.slane %v1323, %v1330
        %v1333 = vunpack.c.l.s4 1934713408
        %v1334 = vunpack.c.0.s8 %v1333
        %v1335 = vlaneseq
        %v1336 = vshrl.u32 %v1335, 7
        %v1337 = vsub.s32 %v1334, %v1336
        %v1338 = vrot.slane %v1324, %v1337
        %v1339 = vcombine.low %v1283, %v1299
        %v1340 = vcombine.high %v1283, %v1299
        %v1342 = vunpack.c.l.s4 1934713408
        %v1343 = vunpack.c.0.s8 %v1342
        %v1344 = vlaneseq
        %v1345 = vshrl.u32 %v1344, 7
        %v1346 = vsub.s32 %v1343, %v1345
        %v1347 = vrot.slane %v1339, %v1346
        %v1349 = vunpack.c.l.s4 1934713408
        %v1350 = vunpack.c.0.s8 %v1349
        %v1351 = vlaneseq
        %v1352 = vshrl.u32 %v1351, 7
        %v1353 = vsub.s32 %v1350, %v1352
        %v1354 = vrot.slane %v1340, %v1353
        %v1355 = vcombine.low %v1290, %v1306
        %v1356 = vcombine.high %v1290, %v1306
        %v1358 = vunpack.c.l.s4 1934713408
        %v1359 = vunpack.c.0.s8 %v1358
        %v1360 = vlaneseq
        %v1361 = vshrl.u32 %v1360, 7
        %v1362 = vsub.s32 %v1359, %v1361
        %v1363 = vrot.slane %v1355, %v1362
        %v1365 = vunpack.c.l.s4 1934713408
        %v1366 = vunpack.c.0.s8 %v1365
        %v1367 = vlaneseq
        %v1368 = vshrl.u32 %v1367, 7
        %v1369 = vsub.s32 %v1366, %v1368
        %v1370 = vrot.slane %v1356, %v1369
        %v1371 = vcombine.low %v1315, %v1347
        %v1372 = vcombine.high %v1315, %v1347
        %v1373 = vcombine.low %v1322, %v1354
        %v1374 = vcombine.high %v1322, %v1354
        %v1375 = vcombine.low %v1331, %v1363
        %v1376 = vcombine.high %v1331, %v1363
        %v1377 = vcombine.low %v1338, %v1370
        %v1378 = vcombine.high %v1338, %v1370
        %v1379 = vld [vmem:[%s2] sm:$0x1]
        %v1380 = vld [vmem:[%s2 + $0x1] sm:$0x1]
        %v1381 = vld [vmem:[%s2 + $0x2] sm:$0x1]
        %v1382 = vld [vmem:[%s2 + $0x3] sm:$0x1]
        %v1383 = vld [vmem:[%s2 + $0x4] sm:$0x1]
        %v1384 = vld [vmem:[%s2 + $0x5] sm:$0x1]
        %v1385 = vld [vmem:[%s2 + $0x6] sm:$0x1]
        %v1386 = vld [vmem:[%s2 + $0x7] sm:$0x1]
        %v1387 = vld [vmem:[%s2 + $0x8] sm:$0x1]
        %v1388 = vld [vmem:[%s2 + $0x9] sm:$0x1]
        %v1389 = vld [vmem:[%s2 + $0xa] sm:$0x1]
        %v1390 = vld [vmem:[%s2 + $0xb] sm:$0x1]
        %v1391 = vld [vmem:[%s2 + $0xc] sm:$0x1]
        %v1392 = vld [vmem:[%s2 + $0xd] sm:$0x1]
        %v1393 = vld [vmem:[%s2 + $0xe] sm:$0x1]
        %v1394 = vld [vmem:[%s2 + $0xf] sm:$0x1]
        %v1411 = vlaneseq
        %v1412 = vshrl.u32 %v1411, 7
        %v1413 = vsub.s32 0, %v1412
        %v1414 = vrot.slane %v1379, %v1413
        %v1415 = vlaneseq
        %v1416 = vshrl.u32 %v1415, 7
        %v1417 = vsub.s32 0, %v1416
        %v1418 = vrot.slane %v1380, %v1417
        %v1419 = vlaneseq
        %v1420 = vshrl.u32 %v1419, 7
        %v1421 = vsub.s32 0, %v1420
        %v1422 = vrot.slane %v1381, %v1421
        %v1423 = vlaneseq
        %v1424 = vshrl.u32 %v1423, 7
        %v1425 = vsub.s32 0, %v1424
        %v1426 = vrot.slane %v1382, %v1425
        %v1427 = vlaneseq
        %v1428 = vshrl.u32 %v1427, 7
        %v1429 = vsub.s32 0, %v1428
        %v1430 = vrot.slane %v1383, %v1429
        %v1431 = vlaneseq
        %v1432 = vshrl.u32 %v1431, 7
        %v1433 = vsub.s32 0, %v1432
        %v1434 = vrot.slane %v1384, %v1433
        %v1435 = vlaneseq
        %v1436 = vshrl.u32 %v1435, 7
        %v1437 = vsub.s32 0, %v1436
        %v1438 = vrot.slane %v1385, %v1437
        %v1439 = vlaneseq
        %v1440 = vshrl.u32 %v1439, 7
        %v1441 = vsub.s32 0, %v1440
        %v1442 = vrot.slane %v1386, %v1441
        %v1443 = vlaneseq
        %v1444 = vshrl.u32 %v1443, 7
        %v1445 = vsub.s32 0, %v1444
        %v1446 = vrot.slane %v1387, %v1445
        %v1447 = vlaneseq
        %v1448 = vshrl.u32 %v1447, 7
        %v1449 = vsub.s32 0, %v1448
        %v1450 = vrot.slane %v1388, %v1449
        %v1451 = vlaneseq
        %v1452 = vshrl.u32 %v1451, 7
        %v1453 = vsub.s32 0, %v1452
        %v1454 = vrot.slane %v1389, %v1453
        %v1455 = vlaneseq
        %v1456 = vshrl.u32 %v1455, 7
        %v1457 = vsub.s32 0, %v1456
        %v1458 = vrot.slane %v1390, %v1457
        %v1459 = vlaneseq
        %v1460 = vshrl.u32 %v1459, 7
        %v1461 = vsub.s32 0, %v1460
        %v1462 = vrot.slane %v1391, %v1461
        %v1463 = vlaneseq
        %v1464 = vshrl.u32 %v1463, 7
        %v1465 = vsub.s32 0, %v1464
        %v1466 = vrot.slane %v1392, %v1465
        %v1467 = vlaneseq
        %v1468 = vshrl.u32 %v1467, 7
        %v1469 = vsub.s32 0, %v1468
        %v1470 = vrot.slane %v1393, %v1469
        %v1471 = vlaneseq
        %v1472 = vshrl.u32 %v1471, 7
        %v1473 = vsub.s32 0, %v1472
        %v1474 = vrot.slane %v1394, %v1473
        %1475 = vset.pattern.permute.xlu0 0
        %1476 = vperm.xlu0 %1475, %v1414
        %v1477 = vpop.permute.xlu0 %1476
        %1479 = vset.pattern.permute.xlu0 0
        %1480 = vperm.xlu0 %1479, %v1418
        %v1481 = vpop.permute.xlu0 %1480
        %1483 = vset.pattern.permute.xlu0 0
        %1484 = vperm.xlu0 %1483, %v1422
        %v1485 = vpop.permute.xlu0 %1484
        %1487 = vset.pattern.permute.xlu0 0
        %1488 = vperm.xlu0 %1487, %v1426
        %v1489 = vpop.permute.xlu0 %1488
        %1491 = vset.pattern.permute.xlu0 0
        %1492 = vperm.xlu0 %1491, %v1430
        %v1493 = vpop.permute.xlu0 %1492
        %1495 = vset.pattern.permute.xlu0 0
        %1496 = vperm.xlu0 %1495, %v1434
        %v1497 = vpop.permute.xlu0 %1496
        %1499 = vset.pattern.permute.xlu0 0
        %1500 = vperm.xlu0 %1499, %v1438
        %v1501 = vpop.permute.xlu0 %1500
        %1503 = vset.pattern.permute.xlu0 0
        %1504 = vperm.xlu0 %1503, %v1442
        %v1505 = vpop.permute.xlu0 %1504
        %1507 = vset.pattern.permute.xlu0 0
        %1508 = vperm.xlu0 %1507, %v1446
        %v1509 = vpop.permute.xlu0 %1508
        %1511 = vset.pattern.permute.xlu0 0
        %1512 = vperm.xlu0 %1511, %v1450
        %v1513 = vpop.permute.xlu0 %1512
        %1515 = vset.pattern.permute.xlu0 0
        %1516 = vperm.xlu0 %1515, %v1454
        %v1517 = vpop.permute.xlu0 %1516
        %1519 = vset.pattern.permute.xlu0 0
        %1520 = vperm.xlu0 %1519, %v1458
        %v1521 = vpop.permute.xlu0 %1520
        %1523 = vset.pattern.permute.xlu0 0
        %1524 = vperm.xlu0 %1523, %v1462
        %v1525 = vpop.permute.xlu0 %1524
        %1527 = vset.pattern.permute.xlu0 0
        %1528 = vperm.xlu0 %1527, %v1466
        %v1529 = vpop.permute.xlu0 %1528
        %1531 = vset.pattern.permute.xlu0 0
        %1532 = vperm.xlu0 %1531, %v1470
        %v1533 = vpop.permute.xlu0 %1532
        %1535 = vset.pattern.permute.xlu0 0
        %1536 = vperm.xlu0 %1535, %v1474
        %v1537 = vpop.permute.xlu0 %1536
        %v1539 = vadd.f32 %v1235, %v1477
        %v1540 = vadd.f32 %v1236, %v1481
        %v1541 = vadd.f32 %v1237, %v1485
        %v1542 = vadd.f32 %v1238, %v1489
        %v1543 = vadd.f32 %v1239, %v1493
        %v1544 = vadd.f32 %v1240, %v1497
        %v1545 = vadd.f32 %v1241, %v1501
        %v1546 = vadd.f32 %v1242, %v1505
        %v1547 = vadd.f32 %v1371, %v1509
        %v1548 = vadd.f32 %v1372, %v1513
        %v1549 = vadd.f32 %v1373, %v1517
        %v1550 = vadd.f32 %v1374, %v1521
        %v1551 = vadd.f32 %v1375, %v1525
        %v1552 = vadd.f32 %v1376, %v1529
        %v1553 = vadd.f32 %v1377, %v1533
        %v1554 = vadd.f32 %v1378, %v1537
        %vm1555 = vcmask 228352
        %1556 = vst.msk [vmem:[%s201] sm:$0xff] %vm1555, %v1539
        %1557 = vst.msk [vmem:[%s201 + $0x8] sm:$0xff] %vm1555, %v1540
        %1558 = vst.msk [vmem:[%s201 + $0x10] sm:$0xff] %vm1555, %v1541
        %1559 = vst.msk [vmem:[%s201 + $0x18] sm:$0xff] %vm1555, %v1542
        %1560 = vst.msk [vmem:[%s201 + $0x20] sm:$0xff] %vm1555, %v1543
        %1561 = vst.msk [vmem:[%s201 + $0x28] sm:$0xff] %vm1555, %v1544
        %1562 = vst.msk [vmem:[%s201 + $0x30] sm:$0xff] %vm1555, %v1545
        %1563 = vst.msk [vmem:[%s201 + $0x38] sm:$0xff] %vm1555, %v1546
        %1564 = vst.msk [vmem:[%s201 + $0x40] sm:$0xff] %vm1555, %v1547
        %1565 = vst.msk [vmem:[%s201 + $0x48] sm:$0xff] %vm1555, %v1548
        %1566 = vst.msk [vmem:[%s201 + $0x50] sm:$0xff] %vm1555, %v1549
        %1567 = vst.msk [vmem:[%s201 + $0x58] sm:$0xff] %vm1555, %v1550
        %1568 = vst.msk [vmem:[%s201 + $0x60] sm:$0xff] %vm1555, %v1551
        %1569 = vst.msk [vmem:[%s201 + $0x68] sm:$0xff] %vm1555, %v1552
        %1570 = vst.msk [vmem:[%s201 + $0x70] sm:$0xff] %vm1555, %v1553
        %1571 = vst.msk [vmem:[%s201 + $0x78] sm:$0xff] %vm1555, %v1554
        %s1572 = sand.u32 %s109, 1
        %s1573 = sand.u32 %s109, 1
        %s1574 = smul.addr %s1573, 128
        %s1575 = scalar_lea.vmem [#allocation4], %s1574
        // Predicated region
        $region37: #{tpu_custom_call.1} parent=31 // pred_check
          %p1576 = pneg %p119
        $region38: #{tpu_custom_call.1} parent=31 // pred_check_branch
          %1578 = sbr.rel (%p1576) target = $region40
        $region39: #{tpu_custom_call.1} parent=31 // pred_region
          %s1579 = smul.addr %s21, 64
          %s1580 = sadd.s32 %s22, %s1579
          %s1581 = smul.addr %s1580, 8
          %s1582 = scalar_lea.vmem %s3, %s1581
          // Predicated region
          $region41: #{tpu_custom_call.1} parent=39 // pred_check
            _
          $region42: #{tpu_custom_call.1} parent=39 // pred_check_branch
            %1584 = sbr.rel (0) target = $region44
          $region43: #{tpu_custom_call.1} parent=39 // pred_region
            // Predicated region
            $region45: #{tpu_custom_call.1} parent=43 // pred_check
              _
            $region46: #{tpu_custom_call.1} parent=43 // pred_check_branch
              %1586 = sbr.rel (0) target = $region48
            $region47: #{tpu_custom_call.1} parent=43 // pred_region
              // Predicated region
              $region60: #{tpu_custom_call.1} parent=47 // pred_check
                _
              $region61: #{tpu_custom_call.1} parent=47 // pred_check_branch
                %1631 = sbr.rel (0) target = $region63
              $region62: #{tpu_custom_call.1} parent=47 // pred_region
                loop: start=0, step=1, limit=1
                $region64: #{tpu_custom_call.1} parent=62 // loop_pre_header
                  _
                $region65: #{tpu_custom_call.1} parent=62 // loop_header
                  %s1633 = sphi 0, %s1637
                  %p1634 = scmp.ge.s32.totalorder %s1633, 1
                  %s1638 = sphi %s1575, %s1575
                  %s1639 = sphi %s1582, %s1582
                $region66: #{tpu_custom_call.1} parent=62 // loop_header_branch
                  %1636 = sbr.rel (%p1634) target = $region70
                $region67: #{tpu_custom_call.1} parent=62 // loop_body
                  %v1640 = vld [vmem:[%s1638] sm:$0xff]
                  %1641 = vst [vmem:[%s1639] sm:$0xff] %v1640
                  %v1642 = vld [vmem:[%s1638 + $0x8] sm:$0xff]
                  %1643 = vst [vmem:[%s1639 + $0x20] sm:$0xff] %v1642
                  %v1644 = vld [vmem:[%s1638 + $0x10] sm:$0xff]
                  %1645 = vst [vmem:[%s1639 + $0x40] sm:$0xff] %v1644
                  %v1646 = vld [vmem:[%s1638 + $0x18] sm:$0xff]
                  %1647 = vst [vmem:[%s1639 + $0x60] sm:$0xff] %v1646
                  %v1648 = vld [vmem:[%s1638 + $0x20] sm:$0xff]
                  %1649 = vst [vmem:[%s1639 + $0x80] sm:$0xff] %v1648
                  %v1650 = vld [vmem:[%s1638 + $0x28] sm:$0xff]
                  %1651 = vst [vmem:[%s1639 + $0xa0] sm:$0xff] %v1650
                  %v1652 = vld [vmem:[%s1638 + $0x30] sm:$0xff]
                  %1653 = vst [vmem:[%s1639 + $0xc0] sm:$0xff] %v1652
                  %v1654 = vld [vmem:[%s1638 + $0x38] sm:$0xff]
                  %1655 = vst [vmem:[%s1639 + $0xe0] sm:$0xff] %v1654
                  %v1656 = vld [vmem:[%s1638 + $0x40] sm:$0xff]
                  %1657 = vst [vmem:[%s1639 + $0x100] sm:$0xff] %v1656
                  %v1658 = vld [vmem:[%s1638 + $0x48] sm:$0xff]
                  %1659 = vst [vmem:[%s1639 + $0x120] sm:$0xff] %v1658
                  %v1660 = vld [vmem:[%s1638 + $0x50] sm:$0xff]
                  %1661 = vst [vmem:[%s1639 + $0x140] sm:$0xff] %v1660
                  %v1662 = vld [vmem:[%s1638 + $0x58] sm:$0xff]
                  %1663 = vst [vmem:[%s1639 + $0x160] sm:$0xff] %v1662
                  %v1664 = vld [vmem:[%s1638 + $0x60] sm:$0xff]
                  %1665 = vst [vmem:[%s1639 + $0x180] sm:$0xff] %v1664
                  %v1666 = vld [vmem:[%s1638 + $0x68] sm:$0xff]
                  %1667 = vst [vmem:[%s1639 + $0x1a0] sm:$0xff] %v1666
                  %v1668 = vld [vmem:[%s1638 + $0x70] sm:$0xff]
                  %1669 = vst [vmem:[%s1639 + $0x1c0] sm:$0xff] %v1668
                  %v1670 = vld [vmem:[%s1638 + $0x78] sm:$0xff]
                  %1671 = vst [vmem:[%s1639 + $0x1e0] sm:$0xff] %v1670
                $region68: #{tpu_custom_call.1} parent=62 // loop_footer
                  %s1637 = sadd.s32 1, %s1633
                $region69: #{tpu_custom_call.1} parent=62 // loop_footer_branch
                  %1632 = sbr.rel target = $region65
                $region70: #{tpu_custom_call.1} parent=62 // loop_exit
                  _
              $region63: #{tpu_custom_call.1} parent=47 // pred_fallthru
                _
              // Predicated region
              $region71: #{tpu_custom_call.1} parent=47 // pred_check
                _
              $region72: #{tpu_custom_call.1} parent=47 // pred_check_branch
                %1673 = sbr.rel target = $region74
              $region73: #{tpu_custom_call.1} parent=47 // pred_region
                _
              $region74: #{tpu_custom_call.1} parent=47 // pred_fallthru
                _
            $region48: #{tpu_custom_call.1} parent=43 // pred_fallthru
              _
            // Predicated region
            $region49: #{tpu_custom_call.1} parent=43 // pred_check
              _
            $region50: #{tpu_custom_call.1} parent=43 // pred_check_branch
              %1588 = sbr.rel target = $region52
            $region51: #{tpu_custom_call.1} parent=43 // pred_region
              loop: start=0, step=1, limit=1
              $region53: #{tpu_custom_call.1} parent=51 // loop_pre_header
                _
              $region54: #{tpu_custom_call.1} parent=51 // loop_header
                %s1591 = sphi 0, %s1595
                %p1592 = scmp.ge.s32.totalorder %s1591, 1
                %s1596 = sphi %s1575, %s1575
                %s1597 = sphi %s1582, %s1582
              $region55: #{tpu_custom_call.1} parent=51 // loop_header_branch
                %1594 = sbr.rel (%p1592) target = $region59
              $region56: #{tpu_custom_call.1} parent=51 // loop_body
                %v1598 = vld [vmem:[%s1596] sm:$0xff]
                %1599 = vst [vmem:[%s1597] sm:$0xff] %v1598
                %v1600 = vld [vmem:[%s1596 + $0x8] sm:$0xff]
                %1601 = vst [vmem:[%s1597 + $0x20] sm:$0xff] %v1600
                %v1602 = vld [vmem:[%s1596 + $0x10] sm:$0xff]
                %1603 = vst [vmem:[%s1597 + $0x40] sm:$0xff] %v1602
                %v1604 = vld [vmem:[%s1596 + $0x18] sm:$0xff]
                %1605 = vst [vmem:[%s1597 + $0x60] sm:$0xff] %v1604
                %v1606 = vld [vmem:[%s1596 + $0x20] sm:$0xff]
                %1607 = vst [vmem:[%s1597 + $0x80] sm:$0xff] %v1606
                %v1608 = vld [vmem:[%s1596 + $0x28] sm:$0xff]
                %1609 = vst [vmem:[%s1597 + $0xa0] sm:$0xff] %v1608
                %v1610 = vld [vmem:[%s1596 + $0x30] sm:$0xff]
                %1611 = vst [vmem:[%s1597 + $0xc0] sm:$0xff] %v1610
                %v1612 = vld [vmem:[%s1596 + $0x38] sm:$0xff]
                %1613 = vst [vmem:[%s1597 + $0xe0] sm:$0xff] %v1612
                %v1614 = vld [vmem:[%s1596 + $0x40] sm:$0xff]
                %1615 = vst [vmem:[%s1597 + $0x100] sm:$0xff] %v1614
                %v1616 = vld [vmem:[%s1596 + $0x48] sm:$0xff]
                %1617 = vst [vmem:[%s1597 + $0x120] sm:$0xff] %v1616
                %v1618 = vld [vmem:[%s1596 + $0x50] sm:$0xff]
                %1619 = vst [vmem:[%s1597 + $0x140] sm:$0xff] %v1618
                %v1620 = vld [vmem:[%s1596 + $0x58] sm:$0xff]
                %1621 = vst [vmem:[%s1597 + $0x160] sm:$0xff] %v1620
                %v1622 = vld [vmem:[%s1596 + $0x60] sm:$0xff]
                %1623 = vst [vmem:[%s1597 + $0x180] sm:$0xff] %v1622
                %v1624 = vld [vmem:[%s1596 + $0x68] sm:$0xff]
                %1625 = vst [vmem:[%s1597 + $0x1a0] sm:$0xff] %v1624
                %v1626 = vld [vmem:[%s1596 + $0x70] sm:$0xff]
                %1627 = vst [vmem:[%s1597 + $0x1c0] sm:$0xff] %v1626
                %v1628 = vld [vmem:[%s1596 + $0x78] sm:$0xff]
                %1629 = vst [vmem:[%s1597 + $0x1e0] sm:$0xff] %v1628
              $region57: #{tpu_custom_call.1} parent=51 // loop_footer
                %s1595 = sadd.s32 1, %s1591
              $region58: #{tpu_custom_call.1} parent=51 // loop_footer_branch
                %1590 = sbr.rel target = $region54
              $region59: #{tpu_custom_call.1} parent=51 // loop_exit
                _
            $region52: #{tpu_custom_call.1} parent=43 // pred_fallthru
              _
          $region44: #{tpu_custom_call.1} parent=39 // pred_fallthru
            _
          %1674 = vnop
        $region40: #{tpu_custom_call.1} parent=31 // pred_fallthru
          _
      $region32: #{tpu_custom_call.1} parent=5 // pred_fallthru
        _
      %p1675 = scmp.le.s32.totalorder 2, %s12
      // Predicated region
      $region75: #{tpu_custom_call.1} parent=5 // pred_check
        %p1676 = pneg %p1675
      $region76: #{tpu_custom_call.1} parent=5 // pred_check_branch
        %1678 = sbr.rel (%p1676) target = $region78
      $region77: #{tpu_custom_call.1} parent=5 // pred_region
        %s1679 = ssub.s32 %s12, 2
        // Predicated region
        $region79: #{tpu_custom_call.1} parent=77 // pred_check
          %p1680 = pneg %p125
        $region80: #{tpu_custom_call.1} parent=77 // pred_check_branch
          %1682 = sbr.rel (%p1680) target = $region82
        $region81: #{tpu_custom_call.1} parent=77 // pred_region
          %s1683 = sand.u32 %s110, 1
          %s1684 = sand.u32 %s110, 1
          %s1685 = smul.addr %s1684, 128
          %s1686 = scalar_lea.vmem [#allocation4], %s1685
        $region82: #{tpu_custom_call.1} parent=77 // pred_fallthru
          _
      $region78: #{tpu_custom_call.1} parent=5 // pred_fallthru
        _
    $region6: #{tpu_custom_call.1} parent=1 // loop_footer
      %s16 = sadd.s32 1, %s12
    $region7: #{tpu_custom_call.1} parent=1 // loop_footer_branch
      %11 = sbr.rel target = $region3
    $region8: #{tpu_custom_call.1} parent=1 // loop_exit
      _
    %1687 = vsyncpa [#allocation3], 1
    %s1688 = scalar_lea.sflag [#allocation3], 1
    %1689 = vsyncpa %s1688, 1

</llo_original>
